<compile_context>
chip_gen: v7x
topology: tpu7x:2x2x1
jax: 0.10.0
libtpu: 0.0.40
codegen_flags: <defaults>
</compile_context>

<pallas_src>
import functools

import jax
import jax.numpy as jnp
from jax.experimental import pallas as pl
from jax.experimental.pallas import tpu as pltpu


def _gelu_exact(x):
    # nn.GELU() default = exact erf-based GELU
    return 0.5 * x * (1.0 + jax.lax.erf(x / jnp.sqrt(jnp.float32(2.0))))


# ----------------------------- weight preparation -----------------------------
def _interp_matrix(n_in, n_out):
    """Row-stochastic bilinear interpolation matrix (align_corners=True)."""
    if n_in == 1:
        return jnp.ones((n_out, 1), jnp.float32)
    src = jnp.arange(n_out, dtype=jnp.float32) * (n_in - 1) / (n_out - 1)
    i0 = jnp.clip(jnp.floor(src).astype(jnp.int32), 0, n_in - 1)
    i1 = jnp.clip(i0 + 1, 0, n_in - 1)
    frac = src - i0.astype(jnp.float32)
    return (jax.nn.one_hot(i0, n_in, dtype=jnp.float32) * (1.0 - frac)[:, None]
            + jax.nn.one_hot(i1, n_in, dtype=jnp.float32) * frac[:, None])


def _band_matrices(w_hwio, W):
    """Lower a 3x3 conv's dx taps (+ zero padding along W) into 3 banded
    matrices B[dy] of shape (W*Cin, W*Cout):
        B[dy, xs*Cin + c, x*Cout + co] = w[dy, xs - x + 1, c, co]  (when valid)
    so that out_rows = sum_dy  P[dy:dy+H, :] @ B[dy]  with P the H-padded,
    lane-packed (H+2, W*Cin) activation."""
    Cin, Cout = w_hwio.shape[2], w_hwio.shape[3]
    xs = jnp.arange(W)
    x = jnp.arange(W)
    dx = jnp.arange(3)
    # S[d, xs, x] = 1  iff  xs == x + d - 1
    sel = (xs[None, :, None] == (x[None, None, :] + dx[:, None, None] - 1))
    sel = sel.astype(jnp.float32)
    band = jnp.einsum("dsx,ydco->yscxo", sel, w_hwio.astype(jnp.float32))
    return band.reshape(3, W * Cin, W * Cout)


def prepare_up_params(raw, N, H1, W1, H2, W2, eps=1e-5):
    """One-time (inference) folding of all module weights into kernel-ready
    constants: fused upsample matrices (conv_ch folded in), merged/collapsed
    banded conv weights (bf16), fused BN scale/shift rows."""
    wch, bch = raw["wch"], raw["bch"]          # (C1, Cout), (Cout,)
    w1, w2 = raw["w1"], raw["w2"]              # (3,3,Cs+Cout,Cout), (3,3,Cout,Cout)
    C1, Cout = wch.shape
    Cs = w1.shape[2] - Cout
    Wo = W2 * Cout

    def bn_fuse(gamma, beta, mean, var, conv_bias):
        s = gamma / jnp.sqrt(var + eps)
        t = s * (conv_bias - mean) + beta
        return s, t

    s1, t1 = bn_fuse(raw["g1"], raw["beta1"], raw["m1"], raw["v1"], raw["b1"])
    s2, t2 = bn_fuse(raw["g2"], raw["beta2"], raw["m2"], raw["v2"], raw["b2"])

    uh = _interp_matrix(H1, H2)                               # (H2, H1)
    uw = _interp_matrix(W1, W2)                               # (W2, W1)
    # Fuse the 1x1 conv_ch into the W-interpolation: (W1*C1, W2*Cout).
    uww = jnp.kron(uw.T, wch.astype(jnp.float32))
    # Block-diagonal H-interpolation so both batch elements ride one matmul.
    uh_blk = jnp.kron(jnp.eye(N, dtype=jnp.float32), uh)      # (N*H2, N*H1)
    bchr = jnp.tile(bch, W2)[None, :]                         # (1, Wo)

    # conv1: merge the x2 branch and the upsampled-x1 branch along K, then
    # collapse the 3 dy taps along K as well -> one (3*W2*(Cs+Cout), Wo) matrix.
    b1a = _band_matrices(w1[:, :, :Cs, :], W2)                # (3, W2*Cs,   Wo)
    b1b = _band_matrices(w1[:, :, Cs:, :], W2)                # (3, W2*Cout, Wo)
    band1 = jnp.concatenate([b1a, b1b], axis=1)               # (3, W2*(Cs+Cout), Wo)
    band1 = band1.reshape(3 * W2 * (Cs + Cout), Wo).astype(jnp.bfloat16)
    band2 = _band_matrices(w2, W2).reshape(3 * Wo, Wo).astype(jnp.bfloat16)

    def row(v):
        return jnp.tile(v, W2)[None, :]                       # (1, Wo)

    return dict(uh_blk=uh_blk, uww=uww, bchr=bchr, band1=band1, band2=band2,
                s1r=row(s1), t1r=row(t1), s2r=row(s2), t2r=row(t2))


# ------------------------------- fused kernel ---------------------------------
def _up_fused_kernel(x1_ref, x2_ref, uhb_ref, uww_ref, bchr_ref,
                     band1_ref, s1r_ref, t1r_ref,
                     band2_ref, s2r_ref, t2r_ref,
                     o_ref, pcat, pact, *, N, H2):
    f32 = jnp.float32
    Wo = o_ref.shape[1]          # W2 * Cout (== 128 lanes)
    Wx2 = x2_ref.shape[1]        # W2 * Cs
    Wcat = pcat.shape[1]         # W2 * (Cs + Cout)

    # ---- bilinear x2 upsample (align_corners=True) fused with conv_ch (1x1),
    #      re-associated so both dots produce full-lane (.., Wo) outputs -------
    x1p = jnp.dot(x1_ref[...], uww_ref[...], preferred_element_type=f32)  # (N*H1, Wo)
    x1c = jnp.dot(uhb_ref[...], x1p, preferred_element_type=f32)          # (N*H2, Wo)
    x1c = x1c + bchr_ref[...]

    # ---- padded, lane-packed [x2 | x1c] scratch; only halo rows are zeroed
    #      (W-direction zero padding is baked into the band matrices) ----------
    zrow_cat = jnp.zeros((1, Wcat), f32)
    zrow_act = jnp.zeros((1, Wo), f32)
    for b in range(N):
        off = b * (H2 + 2)
        pcat[off:off + 1, :] = zrow_cat
        pcat[off + H2 + 1:off + H2 + 2, :] = zrow_cat
        pcat[off + 1:off + 1 + H2, 0:Wx2] = x2_ref[b * H2:(b + 1) * H2, :]
        pcat[off + 1:off + 1 + H2, Wx2:Wcat] = x1c[b * H2:(b + 1) * H2, :]
        pact[off:off + 1, :] = zrow_act
        pact[off + H2 + 1:off + H2 + 2, :] = zrow_act

    def banded_conv(src_ref, band_ref):
        # Collapse batch AND the 3 dy taps into ONE MXU matmul:
        #   LHS (N*H2, 3*K) = per-batch lane-concat of the 3 row-shifted slices
        # (halo handling stays per-batch via the per-batch row offsets).
        parts = []
        for b in range(N):
            off = b * (H2 + 2)
            parts.append(jnp.concatenate(
                [src_ref[off + dy:off + dy + H2, :] for dy in range(3)], axis=1))
        lhs = jnp.concatenate(parts, axis=0).astype(jnp.bfloat16)
        return jnp.dot(lhs, band_ref[...], preferred_element_type=f32)

    # ---- conv1 (3x3 'same' over concat[x2, x1c]) + BN + GELU -----------------
    y1 = _gelu_exact(banded_conv(pcat, band1_ref) * s1r_ref[...] + t1r_ref[...])

    # ---- conv2 (3x3 'same') + BN + GELU --------------------------------------
    for b in range(N):
        off = b * (H2 + 2)
        pact[off + 1:off + 1 + H2, :] = y1[b * H2:(b + 1) * H2, :]
    y2 = _gelu_exact(banded_conv(pact, band2_ref) * s2r_ref[...] + t2r_ref[...])

    # ---- lane-dense store: (N*H2, W2*Cout) = (32, 128) unmasked full-lane vst
    o_ref[...] = y2.astype(o_ref.dtype)


# -------------------------------- Up.forward ----------------------------------
def up_forward(x1_nchw, x2_nchw, prep):
    N, C1, H1, W1 = x1_nchw.shape
    _, Cs, H2, W2 = x2_nchw.shape
    Wo = prep["uww"].shape[1]                 # W2 * Cout
    Cout = Wo // W2
    Wcat = W2 * (Cs + Cout)

    # Layout glue only (tiny tensors): NCHW -> NHWC, then lane-pack (W, C) and
    # fold batch into rows.
    x1 = jnp.transpose(x1_nchw, (0, 2, 3, 1)).reshape(N * H1, W1 * C1)
    x2 = jnp.transpose(x2_nchw, (0, 2, 3, 1)).reshape(N * H2, W2 * Cs)

    macs = ((N * H1) * (W1 * C1) * Wo            # x1 @ uww
            + (N * H2) * (N * H1) * Wo           # uh_blk @ .
            + (N * H2) * (3 * Wcat) * Wo         # conv1
            + (N * H2) * (3 * Wo) * Wo)          # conv2
    bytes_accessed = ((x1.size + x2.size) * 4
                      + (prep["uh_blk"].size + prep["uww"].size) * 4
                      + (prep["band1"].size + prep["band2"].size) * 2
                      + 5 * Wo * 4
                      + (N * H2) * Wo * 4)

    kernel = functools.partial(_up_fused_kernel, N=N, H2=H2)
    out2d = pl.pallas_call(
        kernel,
        out_shape=jax.ShapeDtypeStruct((N * H2, Wo), x1_nchw.dtype),
        scratch_shapes=[
            pltpu.VMEM((N * (H2 + 2), Wcat), jnp.float32),   # padded [x2 | x1c]
            pltpu.VMEM((N * (H2 + 2), Wo), jnp.float32),     # padded conv1 out
        ],
        cost_estimate=pl.CostEstimate(
            flops=2 * macs + 12 * (N * H2) * Wo,
            transcendentals=2 * (N * H2) * Wo,
            bytes_accessed=bytes_accessed),
    )(x1, x2, prep["uh_blk"], prep["uww"], prep["bchr"], prep["band1"],
      prep["s1r"], prep["t1r"], prep["band2"], prep["s2r"], prep["t2r"])

    out = out2d.reshape(N, H2, W2, Cout)
    return jnp.transpose(out, (0, 3, 1, 2))                   # NHWC -> NCHW


# ----------------------------- pure-JAX reference ------------------------------
def bilinear_upsample_x2_align_corners(x_nhwc):
    N, H, W, C = x_nhwc.shape
    H2, W2 = 2 * H, 2 * W

    def idx_weights(n_in, n_out):
        if n_in == 1:
            src = jnp.zeros((n_out,), jnp.float32)
        else:
            src = jnp.arange(n_out, dtype=jnp.float32) * (n_in - 1) / (n_out - 1)
        i0 = jnp.clip(jnp.floor(src).astype(jnp.int32), 0, n_in - 1)
        i1 = jnp.clip(i0 + 1, 0, n_in - 1)
        frac = src - i0.astype(jnp.float32)
        return i0, i1, frac

    h0, h1, hf = idx_weights(H, H2)
    w0, w1, wf = idx_weights(W, W2)
    top = jnp.take(x_nhwc, h0, axis=1)
    bot = jnp.take(x_nhwc, h1, axis=1)
    hf_ = hf[None, :, None, None]
    rows = top * (1.0 - hf_) + bot * hf_
    left = jnp.take(rows, w0, axis=2)
    right = jnp.take(rows, w1, axis=2)
    wf_ = wf[None, None, :, None]
    return left * (1.0 - wf_) + right * wf_


def ref_up(x1_nchw, x2_nchw, raw, eps=1e-5):
    hp = jax.lax.Precision.HIGHEST
    x1 = jnp.transpose(x1_nchw, (0, 2, 3, 1))
    x2 = jnp.transpose(x2_nchw, (0, 2, 3, 1))
    x1u = bilinear_upsample_x2_align_corners(x1)
    x1c = jnp.einsum("nhwc,cd->nhwd", x1u, raw["wch"], precision=hp) + raw["bch"]
    cat = jnp.concatenate([x2, x1c], axis=-1)

    def bn_fuse(gamma, beta, mean, var, conv_bias):
        s = gamma / jnp.sqrt(var + eps)
        return s, s * (conv_bias - mean) + beta

    s1, t1 = bn_fuse(raw["g1"], raw["beta1"], raw["m1"], raw["v1"], raw["b1"])
    s2, t2 = bn_fuse(raw["g2"], raw["beta2"], raw["m2"], raw["v2"], raw["b2"])

    def block(x, w, s, t):
        y = jax.lax.conv_general_dilated(
            x, w, (1, 1), "SAME",
            dimension_numbers=("NHWC", "HWIO", "NHWC"), precision=hp)
        return _gelu_exact(y * s + t)

    y = block(cat, raw["w1"], s1, t1)
    y = block(y, raw["w2"], s2, t2)
    return jnp.transpose(y, (0, 3, 1, 2))


if __name__ == "__main__":
    N = 2
    in_channels = 4          # x1 channels
    out_channels = 8
    skip_channels = 8        # x2 channels
    up_in_channels = skip_channels + out_channels   # concat input to DoubleConv
    H1 = W1 = 8              # x1 spatial -> upsampled to 16x16
    H2 = W2 = 16             # x2 spatial

    key = jax.random.PRNGKey(0)
    k = jax.random.split(key, 16)

    x1 = jax.random.normal(k[0], (N, in_channels, H1, W1), jnp.float32)
    x2 = jax.random.normal(k[1], (N, skip_channels, H2, W2), jnp.float32)

    raw = dict(
        wch=0.2 * jax.random.normal(k[2], (in_channels, out_channels), jnp.float32),
        bch=0.1 * jax.random.normal(k[3], (out_channels,), jnp.float32),
        w1=0.1 * jax.random.normal(k[4], (3, 3, up_in_channels, out_channels), jnp.float32),
        b1=0.1 * jax.random.normal(k[5], (out_channels,), jnp.float32),
        g1=1.0 + 0.1 * jax.random.normal(k[6], (out_channels,), jnp.float32),
        beta1=0.1 * jax.random.normal(k[7], (out_channels,), jnp.float32),
        m1=0.1 * jax.random.normal(k[8], (out_channels,), jnp.float32),
        v1=1.0 + 0.5 * jax.random.uniform(k[9], (out_channels,), jnp.float32),
        w2=0.1 * jax.random.normal(k[10], (3, 3, out_channels, out_channels), jnp.float32),
        b2=0.1 * jax.random.normal(k[11], (out_channels,), jnp.float32),
        g2=1.0 + 0.1 * jax.random.normal(k[12], (out_channels,), jnp.float32),
        beta2=0.1 * jax.random.normal(k[13], (out_channels,), jnp.float32),
        m2=0.1 * jax.random.normal(k[14], (out_channels,), jnp.float32),
        v2=1.0 + 0.5 * jax.random.uniform(k[15], (out_channels,), jnp.float32),
    )

    # One-time inference-style weight folding (BN fuse, conv_ch fuse, band mats).
    prep = prepare_up_params(raw, N, H1, W1, H2, W2)

    fwd = jax.jit(up_forward)
    out = jax.block_until_ready(fwd(x1, x2, prep))
    assert out.shape == (N, out_channels, H2, W2), out.shape

    ref = ref_up(x1, x2, raw)
    max_err = float(jnp.max(jnp.abs(out - ref)))
    # Tolerance reflects the documented bf16 band-weight / conv-activation MXU
    # operands (f32 accumulation); f32-only mode matches to ~1e-5.
    if not bool(jnp.allclose(out, ref, rtol=2e-2, atol=2e-2)):
        raise AssertionError(f"Pallas vs reference mismatch, max abs err={max_err}")

    print("KERNEL_OK")
</pallas_src>

<mosaic_0001>
module attributes {stable_mosaic.version = 11 : i64} {
  func.func @_up_fused_kernel(%arg0: memref<16x32xf32, #tpu.memory_space<vmem>>, %arg1: memref<32x128xf32, #tpu.memory_space<vmem>>, %arg2: memref<32x16xf32, #tpu.memory_space<vmem>>, %arg3: memref<32x128xf32, #tpu.memory_space<vmem>>, %arg4: memref<1x128xf32, #tpu.memory_space<vmem>>, %arg5: memref<768x128xbf16, #tpu.memory_space<vmem>>, %arg6: memref<1x128xf32, #tpu.memory_space<vmem>>, %arg7: memref<1x128xf32, #tpu.memory_space<vmem>>, %arg8: memref<384x128xbf16, #tpu.memory_space<vmem>>, %arg9: memref<1x128xf32, #tpu.memory_space<vmem>>, %arg10: memref<1x128xf32, #tpu.memory_space<vmem>>, %arg11: memref<32x128xf32, #tpu.memory_space<vmem>>, %arg12: memref<36x256xf32, #tpu.memory_space<vmem>>, %arg13: memref<36x128xf32, #tpu.memory_space<vmem>>) attributes {dimension_semantics = [], scalar_prefetch = 0 : i64, scratch_operands = 2 : i64, tpu.core_type = #tpu.core_type<tc>} {
    %c0 = arith.constant 0 : index
    %c0_0 = arith.constant 0 : index
    %0 = vector.load %arg0[%c0, %c0_0] : memref<16x32xf32, #tpu.memory_space<vmem>>, vector<16x32xf32>
    %c0_1 = arith.constant 0 : index
    %c0_2 = arith.constant 0 : index
    %1 = vector.load %arg3[%c0_1, %c0_2] : memref<32x128xf32, #tpu.memory_space<vmem>>, vector<32x128xf32>
    %cst = arith.constant dense<0.000000e+00> : vector<16x128xf32>
    %2 = tpu.matmul %0, %1, %cst {dimension_numbers = #tpu.dot_dimension_numbers<[1], [0], [0], [1], [0, 0, 1, 1], [], []>} : vector<16x32xf32>, vector<32x128xf32>, vector<16x128xf32> -> vector<16x128xf32>
    %c0_3 = arith.constant 0 : index
    %c0_4 = arith.constant 0 : index
    %3 = vector.load %arg2[%c0_3, %c0_4] : memref<32x16xf32, #tpu.memory_space<vmem>>, vector<32x16xf32>
    %cst_5 = arith.constant dense<0.000000e+00> : vector<32x128xf32>
    %4 = tpu.matmul %3, %2, %cst_5 {dimension_numbers = #tpu.dot_dimension_numbers<[1], [0], [0], [1], [0, 0, 1, 1], [], []>} : vector<32x16xf32>, vector<16x128xf32>, vector<32x128xf32> -> vector<32x128xf32>
    %c0_6 = arith.constant 0 : index
    %c0_7 = arith.constant 0 : index
    %5 = vector.load %arg4[%c0_6, %c0_7] : memref<1x128xf32, #tpu.memory_space<vmem>>, vector<1x128xf32>
    %6 = vector.broadcast %5 : vector<1x128xf32> to vector<32x128xf32>
    %7 = arith.addf %4, %6 : vector<32x128xf32>
    %cst_8 = arith.constant 0.000000e+00 : f32
    %8 = vector.broadcast %cst_8 : f32 to vector<1x256xf32>
    %cst_9 = arith.constant 0.000000e+00 : f32
    %9 = vector.broadcast %cst_9 : f32 to vector<1x128xf32>
    %c0_10 = arith.constant 0 : index
    %c0_11 = arith.constant 0 : index
    %10 = vector.load %arg12[%c0_10, %c0_11] : memref<36x256xf32, #tpu.memory_space<vmem>>, vector<1x256xf32>
    tpu.vector_store %arg12[%c0_10, %c0_11], %8 {strides = array<i32>} : memref<36x256xf32, #tpu.memory_space<vmem>>, vector<1x256xf32>,
    %c17 = arith.constant 17 : index
    %c0_12 = arith.constant 0 : index
    %11 = vector.load %arg12[%c17, %c0_12] : memref<36x256xf32, #tpu.memory_space<vmem>>, vector<1x256xf32>
    tpu.vector_store %arg12[%c17, %c0_12], %8 {strides = array<i32>} : memref<36x256xf32, #tpu.memory_space<vmem>>, vector<1x256xf32>,
    %c0_13 = arith.constant 0 : index
    %c0_14 = arith.constant 0 : index
    %12 = vector.load %arg1[%c0_13, %c0_14] : memref<32x128xf32, #tpu.memory_space<vmem>>, vector<16x128xf32>
    %c1 = arith.constant 1 : index
    %c0_15 = arith.constant 0 : index
    %13 = vector.load %arg12[%c1, %c0_15] : memref<36x256xf32, #tpu.memory_space<vmem>>, vector<16x128xf32>
    tpu.vector_store %arg12[%c1, %c0_15], %12 {strides = array<i32>} : memref<36x256xf32, #tpu.memory_space<vmem>>, vector<16x128xf32>,
    %14 = vector.extract_strided_slice %7 {offsets = [0, 0], sizes = [16, 128], strides = [1, 1]} : vector<32x128xf32> to vector<16x128xf32>
    %c1_16 = arith.constant 1 : index
    %c128 = arith.constant 128 : index
    %15 = vector.load %arg12[%c1_16, %c128] : memref<36x256xf32, #tpu.memory_space<vmem>>, vector<16x128xf32>
    tpu.vector_store %arg12[%c1_16, %c128], %14 {strides = array<i32>} : memref<36x256xf32, #tpu.memory_space<vmem>>, vector<16x128xf32>,
    %c0_17 = arith.constant 0 : index
    %c0_18 = arith.constant 0 : index
    %16 = vector.load %arg13[%c0_17, %c0_18] : memref<36x128xf32, #tpu.memory_space<vmem>>, vector<1x128xf32>
    tpu.vector_store %arg13[%c0_17, %c0_18], %9 {strides = array<i32>} : memref<36x128xf32, #tpu.memory_space<vmem>>, vector<1x128xf32>,
    %c17_19 = arith.constant 17 : index
    %c0_20 = arith.constant 0 : index
    %17 = vector.load %arg13[%c17_19, %c0_20] : memref<36x128xf32, #tpu.memory_space<vmem>>, vector<1x128xf32>
    tpu.vector_store %arg13[%c17_19, %c0_20], %9 {strides = array<i32>} : memref<36x128xf32, #tpu.memory_space<vmem>>, vector<1x128xf32>,
    %c18 = arith.constant 18 : index
    %c0_21 = arith.constant 0 : index
    %18 = vector.load %arg12[%c18, %c0_21] : memref<36x256xf32, #tpu.memory_space<vmem>>, vector<1x256xf32>
    tpu.vector_store %arg12[%c18, %c0_21], %8 {strides = array<i32>} : memref<36x256xf32, #tpu.memory_space<vmem>>, vector<1x256xf32>,
    %c35 = arith.constant 35 : index
    %c0_22 = arith.constant 0 : index
    %19 = vector.load %arg12[%c35, %c0_22] : memref<36x256xf32, #tpu.memory_space<vmem>>, vector<1x256xf32>
    tpu.vector_store %arg12[%c35, %c0_22], %8 {strides = array<i32>} : memref<36x256xf32, #tpu.memory_space<vmem>>, vector<1x256xf32>,
    %c16 = arith.constant 16 : index
    %c0_23 = arith.constant 0 : index
    %20 = vector.load %arg1[%c16, %c0_23] : memref<32x128xf32, #tpu.memory_space<vmem>>, vector<16x128xf32>
    %c19 = arith.constant 19 : index
    %c0_24 = arith.constant 0 : index
    %21 = vector.load %arg12[%c19, %c0_24] : memref<36x256xf32, #tpu.memory_space<vmem>>, vector<16x128xf32>
    tpu.vector_store %arg12[%c19, %c0_24], %20 {strides = array<i32>} : memref<36x256xf32, #tpu.memory_space<vmem>>, vector<16x128xf32>,
    %22 = vector.extract_strided_slice %7 {offsets = [16, 0], sizes = [16, 128], strides = [1, 1]} : vector<32x128xf32> to vector<16x128xf32>
    %c19_25 = arith.constant 19 : index
    %c128_26 = arith.constant 128 : index
    %23 = vector.load %arg12[%c19_25, %c128_26] : memref<36x256xf32, #tpu.memory_space<vmem>>, vector<16x128xf32>
    tpu.vector_store %arg12[%c19_25, %c128_26], %22 {strides = array<i32>} : memref<36x256xf32, #tpu.memory_space<vmem>>, vector<16x128xf32>,
    %c18_27 = arith.constant 18 : index
    %c0_28 = arith.constant 0 : index
    %24 = vector.load %arg13[%c18_27, %c0_28] : memref<36x128xf32, #tpu.memory_space<vmem>>, vector<1x128xf32>
    tpu.vector_store %arg13[%c18_27, %c0_28], %9 {strides = array<i32>} : memref<36x128xf32, #tpu.memory_space<vmem>>, vector<1x128xf32>,
    %c35_29 = arith.constant 35 : index
    %c0_30 = arith.constant 0 : index
    %25 = vector.load %arg13[%c35_29, %c0_30] : memref<36x128xf32, #tpu.memory_space<vmem>>, vector<1x128xf32>
    tpu.vector_store %arg13[%c35_29, %c0_30], %9 {strides = array<i32>} : memref<36x128xf32, #tpu.memory_space<vmem>>, vector<1x128xf32>,
    %c0_31 = arith.constant 0 : index
    %c0_32 = arith.constant 0 : index
    %26 = vector.load %arg12[%c0_31, %c0_32] : memref<36x256xf32, #tpu.memory_space<vmem>>, vector<16x256xf32>
    %c1_33 = arith.constant 1 : index
    %c0_34 = arith.constant 0 : index
    %27 = vector.load %arg12[%c1_33, %c0_34] : memref<36x256xf32, #tpu.memory_space<vmem>>, vector<16x256xf32>
    %c2 = arith.constant 2 : index
    %c0_35 = arith.constant 0 : index
    %28 = vector.load %arg12[%c2, %c0_35] : memref<36x256xf32, #tpu.memory_space<vmem>>, vector<16x256xf32>
    %29 = tpu.concatenate %26, %27, %28 in 1 : vector<16x256xf32>, vector<16x256xf32>, vector<16x256xf32> -> vector<16x768xf32>
    %c18_36 = arith.constant 18 : index
    %c0_37 = arith.constant 0 : index
    %30 = vector.load %arg12[%c18_36, %c0_37] : memref<36x256xf32, #tpu.memory_space<vmem>>, vector<16x256xf32>
    %c19_38 = arith.constant 19 : index
    %c0_39 = arith.constant 0 : index
    %31 = vector.load %arg12[%c19_38, %c0_39] : memref<36x256xf32, #tpu.memory_space<vmem>>, vector<16x256xf32>
    %c20 = arith.constant 20 : index
    %c0_40 = arith.constant 0 : index
    %32 = vector.load %arg12[%c20, %c0_40] : memref<36x256xf32, #tpu.memory_space<vmem>>, vector<16x256xf32>
    %33 = tpu.concatenate %30, %31, %32 in 1 : vector<16x256xf32>, vector<16x256xf32>, vector<16x256xf32> -> vector<16x768xf32>
    %34 = tpu.concatenate %29, %33 in 0 : vector<16x768xf32>, vector<16x768xf32> -> vector<32x768xf32>
    %35 = arith.truncf %34 : vector<32x768xf32> to vector<32x768xbf16>
    %c0_41 = arith.constant 0 : index
    %c0_42 = arith.constant 0 : index
    %36 = vector.load %arg5[%c0_41, %c0_42] : memref<768x128xbf16, #tpu.memory_space<vmem>>, vector<768x128xbf16>
    %cst_43 = arith.constant dense<0.000000e+00> : vector<32x128xf32>
    %37 = tpu.matmul %35, %36, %cst_43 {dimension_numbers = #tpu.dot_dimension_numbers<[1], [0], [0], [1], [0, 0, 1, 1], [], []>} : vector<32x768xbf16>, vector<768x128xbf16>, vector<32x128xf32> -> vector<32x128xf32>
    %c0_44 = arith.constant 0 : index
    %c0_45 = arith.constant 0 : index
    %38 = vector.load %arg6[%c0_44, %c0_45] : memref<1x128xf32, #tpu.memory_space<vmem>>, vector<1x128xf32>
    %39 = vector.broadcast %38 : vector<1x128xf32> to vector<32x128xf32>
    %40 = arith.mulf %37, %39 : vector<32x128xf32>
    %c0_46 = arith.constant 0 : index
    %c0_47 = arith.constant 0 : index
    %41 = vector.load %arg7[%c0_46, %c0_47] : memref<1x128xf32, #tpu.memory_space<vmem>>, vector<1x128xf32>
    %42 = vector.broadcast %41 : vector<1x128xf32> to vector<32x128xf32>
    %43 = arith.addf %40, %42 : vector<32x128xf32>
    %cst_48 = arith.constant 5.000000e-01 : f32
    %44 = vector.broadcast %cst_48 : f32 to vector<32x128xf32>
    %45 = arith.mulf %44, %43 : vector<32x128xf32>
    %cst_49 = arith.constant 2.000000e+00 : f32
    %46 = math.sqrt %cst_49 : f32
    %47 = vector.broadcast %46 : f32 to vector<32x128xf32>
    %48 = arith.divf %43, %47 : vector<32x128xf32>
    %49 = math.erf %48 : vector<32x128xf32>
    %cst_50 = arith.constant 1.000000e+00 : f32
    %50 = vector.broadcast %cst_50 : f32 to vector<32x128xf32>
    %51 = arith.addf %50, %49 : vector<32x128xf32>
    %52 = arith.mulf %45, %51 : vector<32x128xf32>
    %53 = vector.extract_strided_slice %52 {offsets = [0, 0], sizes = [16, 128], strides = [1, 1]} : vector<32x128xf32> to vector<16x128xf32>
    %c1_51 = arith.constant 1 : index
    %c0_52 = arith.constant 0 : index
    %54 = vector.load %arg13[%c1_51, %c0_52] : memref<36x128xf32, #tpu.memory_space<vmem>>, vector<16x128xf32>
    tpu.vector_store %arg13[%c1_51, %c0_52], %53 {strides = array<i32>} : memref<36x128xf32, #tpu.memory_space<vmem>>, vector<16x128xf32>,
    %55 = vector.extract_strided_slice %52 {offsets = [16, 0], sizes = [16, 128], strides = [1, 1]} : vector<32x128xf32> to vector<16x128xf32>
    %c19_53 = arith.constant 19 : index
    %c0_54 = arith.constant 0 : index
    %56 = vector.load %arg13[%c19_53, %c0_54] : memref<36x128xf32, #tpu.memory_space<vmem>>, vector<16x128xf32>
    tpu.vector_store %arg13[%c19_53, %c0_54], %55 {strides = array<i32>} : memref<36x128xf32, #tpu.memory_space<vmem>>, vector<16x128xf32>,
    %c0_55 = arith.constant 0 : index
    %c0_56 = arith.constant 0 : index
    %57 = vector.load %arg13[%c0_55, %c0_56] : memref<36x128xf32, #tpu.memory_space<vmem>>, vector<16x128xf32>
    %c1_57 = arith.constant 1 : index
    %c0_58 = arith.constant 0 : index
    %58 = vector.load %arg13[%c1_57, %c0_58] : memref<36x128xf32, #tpu.memory_space<vmem>>, vector<16x128xf32>
    %c2_59 = arith.constant 2 : index
    %c0_60 = arith.constant 0 : index
    %59 = vector.load %arg13[%c2_59, %c0_60] : memref<36x128xf32, #tpu.memory_space<vmem>>, vector<16x128xf32>
    %60 = tpu.concatenate %57, %58, %59 in 1 : vector<16x128xf32>, vector<16x128xf32>, vector<16x128xf32> -> vector<16x384xf32>
    %c18_61 = arith.constant 18 : index
    %c0_62 = arith.constant 0 : index
    %61 = vector.load %arg13[%c18_61, %c0_62] : memref<36x128xf32, #tpu.memory_space<vmem>>, vector<16x128xf32>
    %c19_63 = arith.constant 19 : index
    %c0_64 = arith.constant 0 : index
    %62 = vector.load %arg13[%c19_63, %c0_64] : memref<36x128xf32, #tpu.memory_space<vmem>>, vector<16x128xf32>
    %c20_65 = arith.constant 20 : index
    %c0_66 = arith.constant 0 : index
    %63 = vector.load %arg13[%c20_65, %c0_66] : memref<36x128xf32, #tpu.memory_space<vmem>>, vector<16x128xf32>
    %64 = tpu.concatenate %61, %62, %63 in 1 : vector<16x128xf32>, vector<16x128xf32>, vector<16x128xf32> -> vector<16x384xf32>
    %65 = tpu.concatenate %60, %64 in 0 : vector<16x384xf32>, vector<16x384xf32> -> vector<32x384xf32>
    %66 = arith.truncf %65 : vector<32x384xf32> to vector<32x384xbf16>
    %c0_67 = arith.constant 0 : index
    %c0_68 = arith.constant 0 : index
    %67 = vector.load %arg8[%c0_67, %c0_68] : memref<384x128xbf16, #tpu.memory_space<vmem>>, vector<384x128xbf16>
    %cst_69 = arith.constant dense<0.000000e+00> : vector<32x128xf32>
    %68 = tpu.matmul %66, %67, %cst_69 {dimension_numbers = #tpu.dot_dimension_numbers<[1], [0], [0], [1], [0, 0, 1, 1], [], []>} : vector<32x384xbf16>, vector<384x128xbf16>, vector<32x128xf32> -> vector<32x128xf32>
    %c0_70 = arith.constant 0 : index
    %c0_71 = arith.constant 0 : index
    %69 = vector.load %arg9[%c0_70, %c0_71] : memref<1x128xf32, #tpu.memory_space<vmem>>, vector<1x128xf32>
    %70 = vector.broadcast %69 : vector<1x128xf32> to vector<32x128xf32>
    %71 = arith.mulf %68, %70 : vector<32x128xf32>
    %c0_72 = arith.constant 0 : index
    %c0_73 = arith.constant 0 : index
    %72 = vector.load %arg10[%c0_72, %c0_73] : memref<1x128xf32, #tpu.memory_space<vmem>>, vector<1x128xf32>
    %73 = vector.broadcast %72 : vector<1x128xf32> to vector<32x128xf32>
    %74 = arith.addf %71, %73 : vector<32x128xf32>
    %cst_74 = arith.constant 5.000000e-01 : f32
    %75 = vector.broadcast %cst_74 : f32 to vector<32x128xf32>
    %76 = arith.mulf %75, %74 : vector<32x128xf32>
    %cst_75 = arith.constant 2.000000e+00 : f32
    %77 = math.sqrt %cst_75 : f32
    %78 = vector.broadcast %77 : f32 to vector<32x128xf32>
    %79 = arith.divf %74, %78 : vector<32x128xf32>
    %80 = math.erf %79 : vector<32x128xf32>
    %cst_76 = arith.constant 1.000000e+00 : f32
    %81 = vector.broadcast %cst_76 : f32 to vector<32x128xf32>
    %82 = arith.addf %81, %80 : vector<32x128xf32>
    %83 = arith.mulf %76, %82 : vector<32x128xf32>
    %c0_77 = arith.constant 0 : index
    %c0_78 = arith.constant 0 : index
    %84 = vector.load %arg11[%c0_77, %c0_78] : memref<32x128xf32, #tpu.memory_space<vmem>>, vector<32x128xf32>
    tpu.vector_store %arg11[%c0_77, %c0_78], %83 {strides = array<i32>} : memref<32x128xf32, #tpu.memory_space<vmem>>, vector<32x128xf32>,
    return
  }
}

</mosaic_0001>

<llo_original>
// kernel: up_forward.1
$region0: #{up_forward.1}
  #allocation0 [shape = 'u32[]', space=smem, size = 0x4, offset = 0x4, fixed_abs, tag = 'smem constant byte address 0x4 - core index']
  #allocation1 [shape = 'u32[144,128]{1,0:T(1,128)}', space=vmem, size = 0x12000, scoped, tag = 'internal scratch']
  #allocation2 [shape = 'f32[36,256]{1,0:T(8,128)}', space=vmem, size = 0xa000, scoped, tag = 'scratch operand']
  #allocation3 [shape = 'f32[36,128]{1,0:T(8,128)}', space=vmem, size = 0x5000, scoped, tag = 'scratch operand']
  %s0 = inlined_call_operand.vmem [shape: f32[16,32], index: 0, kind: input, shape index: {}]
  %s1 = inlined_call_operand.vmem [shape: f32[32,128], index: 1, kind: input, shape index: {}]
  %s2 = inlined_call_operand.vmem [shape: f32[32,16], index: 2, kind: input, shape index: {}]
  %s3 = inlined_call_operand.vmem [shape: f32[32,128], index: 3, kind: input, shape index: {}]
  %s4 = inlined_call_operand.vmem [shape: f32[1,128], index: 4, kind: input, shape index: {}]
  %s5 = inlined_call_operand.vmem [shape: bf16[768,128], index: 5, kind: input, shape index: {}]
  %s6 = inlined_call_operand.vmem [shape: f32[1,128], index: 6, kind: input, shape index: {}]
  %s7 = inlined_call_operand.vmem [shape: f32[1,128], index: 7, kind: input, shape index: {}]
  %s8 = inlined_call_operand.vmem [shape: bf16[384,128], index: 8, kind: input, shape index: {}]
  %s9 = inlined_call_operand.vmem [shape: f32[1,128], index: 9, kind: input, shape index: {}]
  %s10 = inlined_call_operand.vmem [shape: f32[1,128], index: 10, kind: input, shape index: {}]
  %s11 = inlined_call_operand.vmem [shape: f32[32,128], index: 11, kind: output, shape index: {}]
  %s12 = sld [smem:[#allocation0]]
  $region54: #{up_forward.1} parent=0
    _
  %s14 = ssub.s32 1, %s12
  %s15 = scalar_select 0, %s14, %s12
  // Predicated region
  $region2: #{up_forward.1} parent=0 // pred_check
    _
  $region3: #{up_forward.1} parent=0 // pred_check_branch
    %17 = sbr.rel (0) target = $region5
  $region4: #{up_forward.1} parent=0 // pred_region
    _
  $region5: #{up_forward.1} parent=0 // pred_fallthru
    _
  // Predicated region
  $region6: #{up_forward.1} parent=0 // pred_check
    _
  $region7: #{up_forward.1} parent=0 // pred_check_branch
    %19 = sbr.rel (0) target = $region9
  $region8: #{up_forward.1} parent=0 // pred_region
    _
  $region9: #{up_forward.1} parent=0 // pred_fallthru
    _
  // Predicated region
  $region10: #{up_forward.1} parent=0 // pred_check
    _
  $region11: #{up_forward.1} parent=0 // pred_check_branch
    %21 = sbr.rel (0) target = $region13
  $region12: #{up_forward.1} parent=0 // pred_region
    _
  $region13: #{up_forward.1} parent=0 // pred_fallthru
    _
  // Predicated region
  $region14: #{up_forward.1} parent=0 // pred_check
    _
  $region15: #{up_forward.1} parent=0 // pred_check_branch
    %23 = sbr.rel (0) target = $region17
  $region16: #{up_forward.1} parent=0 // pred_region
    _
  $region17: #{up_forward.1} parent=0 // pred_fallthru
    _
  // Predicated region
  $region18: #{up_forward.1} parent=0 // pred_check
    _
  $region19: #{up_forward.1} parent=0 // pred_check_branch
    %25 = sbr.rel (0) target = $region21
  $region20: #{up_forward.1} parent=0 // pred_region
    _
  $region21: #{up_forward.1} parent=0 // pred_fallthru
    _
  // Predicated region
  $region22: #{up_forward.1} parent=0 // pred_check
    _
  $region23: #{up_forward.1} parent=0 // pred_check_branch
    %27 = sbr.rel (0) target = $region25
  $region24: #{up_forward.1} parent=0 // pred_region
    _
  $region25: #{up_forward.1} parent=0 // pred_fallthru
    _
  // Predicated region
  $region26: #{up_forward.1} parent=0 // pred_check
    _
  $region27: #{up_forward.1} parent=0 // pred_check_branch
    %29 = sbr.rel (0) target = $region29
  $region28: #{up_forward.1} parent=0 // pred_region
    _
  $region29: #{up_forward.1} parent=0 // pred_fallthru
    _
  // Predicated region
  $region30: #{up_forward.1} parent=0 // pred_check
    _
  $region31: #{up_forward.1} parent=0 // pred_check_branch
    %31 = sbr.rel (0) target = $region33
  $region32: #{up_forward.1} parent=0 // pred_region
    _
  $region33: #{up_forward.1} parent=0 // pred_fallthru
    _
  // Predicated region
  $region34: #{up_forward.1} parent=0 // pred_check
    _
  $region35: #{up_forward.1} parent=0 // pred_check_branch
    %33 = sbr.rel (0) target = $region37
  $region36: #{up_forward.1} parent=0 // pred_region
    _
  $region37: #{up_forward.1} parent=0 // pred_fallthru
    _
  // Predicated region
  $region38: #{up_forward.1} parent=0 // pred_check
    _
  $region39: #{up_forward.1} parent=0 // pred_check_branch
    %35 = sbr.rel (0) target = $region41
  $region40: #{up_forward.1} parent=0 // pred_region
    _
  $region41: #{up_forward.1} parent=0 // pred_fallthru
    _
  // Predicated region
  $region42: #{up_forward.1} parent=0 // pred_check
    _
  $region43: #{up_forward.1} parent=0 // pred_check_branch
    %37 = sbr.rel (0) target = $region45
  $region44: #{up_forward.1} parent=0 // pred_region
    _
  $region45: #{up_forward.1} parent=0 // pred_fallthru
    _
  %v39 = vld [vmem:[%s0] sm:$0xff]
  %v40 = vld [vmem:[%s0 + $0x8] sm:$0xff]
  %v41 = vld [vmem:[%s3] sm:$0xff]
  %v42 = vld [vmem:[%s3 + $0x8] sm:$0xff]
  %v43 = vld [vmem:[%s3 + $0x10] sm:$0xff]
  %v44 = vld [vmem:[%s3 + $0x18] sm:$0xff]
  %vm45 = vcmask 261120
  %v47 = vsel %vm45, %v39, 0
  %v50 = vsel %vm45, %v40, 0
  %52 = vmatprep.subr.mxu0 0.0
  %53 = vmatpush1.msra.mxu0 %v41
  %54 = vmatprep.subr.mxu0 0.0
  %55 = vmatpush1.msra.mxu0 %v42
  %56 = vmatprep.subr.mxu0 0.0
  %57 = vmatpush1.msra.mxu0 %v43
  %58 = vmatprep.subr.mxu0 0.0
  %59 = vmatpush1.msra.mxu0 %v44
  %60 = vmatprep.subr.mxu0 0.0
  %61 = vmatpush1.msra.mxu0 0.0
  %62 = vmatprep.subr.mxu0 0.0
  %63 = vmatpush1.msra.mxu0 0.0
  %64 = vmatprep.subr.mxu0 0.0
  %65 = vmatpush1.msra.mxu0 0.0
  %66 = vmatprep.subr.mxu0 0.0
  %67 = vmatpush1.msra.mxu0 0.0
  %68 = vmatprep.subr.mxu0 0.0
  %69 = vmatpush1.msra.mxu0 0.0
  %70 = vmatprep.subr.mxu0 0.0
  %71 = vmatpush1.msra.mxu0 0.0
  %72 = vmatprep.subr.mxu0 0.0
  %73 = vmatpush1.msra.mxu0 0.0
  %74 = vmatprep.subr.mxu0 0.0
  %75 = vmatpush1.msra.mxu0 0.0
  %76 = vmatprep.subr.mxu0 0.0
  %77 = vmatpush1.msra.mxu0 0.0
  %78 = vmatprep.subr.mxu0 0.0
  %79 = vmatpush1.msra.mxu0 0.0
  %80 = vmatprep.subr.mxu0 0.0
  %81 = vmatpush1.msra.mxu0 0.0
  %82 = vmatprep.subr.mxu0 0.0
  %83 = vmatpush1.msra.mxu0 0.0
  %84 = vmatprep.subr.mxu0 0.0
  %85 = vmatpush1.msra.mxu0 0.0
  %86 = vmatprep.subr.mxu0 0.0
  %87 = vmatpush1.msra.mxu0 0.0
  %88 = vmatprep.subr.mxu0 0.0
  %89 = vmatpush1.msra.mxu0 0.0
  %90 = vmatprep.subr.mxu0 0.0
  %91 = vmatpush1.msra.mxu0 0.0
  %92 = vmatprep.subr.mxu0 0.0
  %93 = vmatpush1.msra.mxu0 0.0
  %94 = vmatprep.subr.mxu0 0.0
  %95 = vmatpush1.msra.mxu0 0.0
  %96 = vmatprep.subr.mxu0 0.0
  %97 = vmatpush1.msra.mxu0 0.0
  %98 = vmatprep.subr.mxu0 0.0
  %99 = vmatpush1.msra.mxu0 0.0
  %100 = vmatprep.subr.mxu0 0.0
  %101 = vmatpush1.msra.mxu0 0.0
  %102 = vmatprep.subr.mxu0 0.0
  %103 = vmatpush1.msra.mxu0 0.0
  %104 = vmatprep.subr.mxu0 0.0
  %105 = vmatpush1.msra.mxu0 0.0
  %106 = vmatprep.subr.mxu0 0.0
  %107 = vmatpush1.msra.mxu0 0.0
  %108 = vmatprep.subr.mxu0 0.0
  %109 = vmatpush1.msra.mxu0 0.0
  %110 = vmatprep.subr.mxu0 0.0
  %111 = vmatpush1.msra.mxu0 0.0
  %112 = vmatprep.subr.mxu0 0.0
  %113 = vmatpush1.msra.mxu0 0.0
  %114 = vmatprep.subr.mxu0 0.0
  %115 = vmatpush1.msra.mxu0 0.0
  %116 = vmatprep.mubr.f32.mxu0 0.0
  %117 = vmatmul.mubr.f32.gmra.mrb[0].mxu0 %v47
  %v118 = vpop.f32.mrb[0].mxu0
  %v119 = vadd.f32 0.0, %v118
  %v120 = vpop.f32.mrb[0].mxu0
  %121 = vmatprep.mubr.f32.mxu0 0.0
  %122 = vmatmul.mubr.f32.gmra.mrb[0].mxu0 %v50
  %v123 = vpop.f32.mrb[0].mxu0
  %v124 = vadd.f32 0.0, %v123
  %v125 = vpop.f32.mrb[0].mxu0
  %126 = vdwg.mxu0
  %v127 = vld [vmem:[%s2] sm:$0xff]
  %v128 = vld [vmem:[%s2 + $0x8] sm:$0xff]
  %v129 = vld [vmem:[%s2 + $0x10] sm:$0xff]
  %v130 = vld [vmem:[%s2 + $0x18] sm:$0xff]
  %v131 = vld [vmem:[%s4] sm:$0x1]
  %v133 = vlaneseq
  %v134 = vshrl.u32 %v133, 7
  %v135 = vsub.s32 0, %v134
  %v136 = vrot.slane %v131, %v135
  %vm138 = vcmask 130048
  %v140 = vsel %vm138, %v127, 0
  %v143 = vsel %vm138, %v128, 0
  %v146 = vsel %vm138, %v129, 0
  %v149 = vsel %vm138, %v130, 0
  %151 = vmatprep.subr.mxu0 0.0
  %152 = vmatpush1.msra.mxu0 %v119
  %153 = vmatprep.subr.mxu0 0.0
  %154 = vmatpush1.msra.mxu0 %v124
  %155 = vmatprep.subr.mxu0 0.0
  %156 = vmatpush1.msra.mxu0 0.0
  %157 = vmatprep.subr.mxu0 0.0
  %158 = vmatpush1.msra.mxu0 0.0
  %159 = vmatprep.subr.mxu0 0.0
  %160 = vmatpush1.msra.mxu0 0.0
  %161 = vmatprep.subr.mxu0 0.0
  %162 = vmatpush1.msra.mxu0 0.0
  %163 = vmatprep.subr.mxu0 0.0
  %164 = vmatpush1.msra.mxu0 0.0
  %165 = vmatprep.subr.mxu0 0.0
  %166 = vmatpush1.msra.mxu0 0.0
  %167 = vmatprep.subr.mxu0 0.0
  %168 = vmatpush1.msra.mxu0 0.0
  %169 = vmatprep.subr.mxu0 0.0
  %170 = vmatpush1.msra.mxu0 0.0
  %171 = vmatprep.subr.mxu0 0.0
  %172 = vmatpush1.msra.mxu0 0.0
  %173 = vmatprep.subr.mxu0 0.0
  %174 = vmatpush1.msra.mxu0 0.0
  %175 = vmatprep.subr.mxu0 0.0
  %176 = vmatpush1.msra.mxu0 0.0
  %177 = vmatprep.subr.mxu0 0.0
  %178 = vmatpush1.msra.mxu0 0.0
  %179 = vmatprep.subr.mxu0 0.0
  %180 = vmatpush1.msra.mxu0 0.0
  %181 = vmatprep.subr.mxu0 0.0
  %182 = vmatpush1.msra.mxu0 0.0
  %183 = vmatprep.subr.mxu0 0.0
  %184 = vmatpush1.msra.mxu0 0.0
  %185 = vmatprep.subr.mxu0 0.0
  %186 = vmatpush1.msra.mxu0 0.0
  %187 = vmatprep.subr.mxu0 0.0
  %188 = vmatpush1.msra.mxu0 0.0
  %189 = vmatprep.subr.mxu0 0.0
  %190 = vmatpush1.msra.mxu0 0.0
  %191 = vmatprep.subr.mxu0 0.0
  %192 = vmatpush1.msra.mxu0 0.0
  %193 = vmatprep.subr.mxu0 0.0
  %194 = vmatpush1.msra.mxu0 0.0
  %195 = vmatprep.subr.mxu0 0.0
  %196 = vmatpush1.msra.mxu0 0.0
  %197 = vmatprep.subr.mxu0 0.0
  %198 = vmatpush1.msra.mxu0 0.0
  %199 = vmatprep.subr.mxu0 0.0
  %200 = vmatpush1.msra.mxu0 0.0
  %201 = vmatprep.subr.mxu0 0.0
  %202 = vmatpush1.msra.mxu0 0.0
  %203 = vmatprep.subr.mxu0 0.0
  %204 = vmatpush1.msra.mxu0 0.0
  %205 = vmatprep.subr.mxu0 0.0
  %206 = vmatpush1.msra.mxu0 0.0
  %207 = vmatprep.subr.mxu0 0.0
  %208 = vmatpush1.msra.mxu0 0.0
  %209 = vmatprep.subr.mxu0 0.0
  %210 = vmatpush1.msra.mxu0 0.0
  %211 = vmatprep.subr.mxu0 0.0
  %212 = vmatpush1.msra.mxu0 0.0
  %213 = vmatprep.subr.mxu0 0.0
  %214 = vmatpush1.msra.mxu0 0.0
  %215 = vmatprep.mubr.f32.mxu0 0.0
  %216 = vmatmul.mubr.f32.gmra.mrb[0].mxu0 %v140
  %v217 = vpop.f32.mrb[0].mxu0
  %v218 = vadd.f32 %v136, %v217
  %v219 = vpop.f32.mrb[0].mxu0
  %220 = vmatprep.mubr.f32.mxu0 0.0
  %221 = vmatmul.mubr.f32.gmra.mrb[0].mxu0 %v143
  %v222 = vpop.f32.mrb[0].mxu0
  %v223 = vadd.f32 %v136, %v222
  %v224 = vpop.f32.mrb[0].mxu0
  %225 = vmatprep.mubr.f32.mxu0 0.0
  %226 = vmatmul.mubr.f32.gmra.mrb[0].mxu0 %v146
  %v227 = vpop.f32.mrb[0].mxu0
  %v228 = vadd.f32 %v136, %v227
  %v229 = vpop.f32.mrb[0].mxu0
  %230 = vmatprep.mubr.f32.mxu0 0.0
  %231 = vmatmul.mubr.f32.gmra.mrb[0].mxu0 %v149
  %v232 = vpop.f32.mrb[0].mxu0
  %v233 = vadd.f32 %v136, %v232
  %v234 = vpop.f32.mrb[0].mxu0
  %235 = vdwg.mxu0
  %v236 = vlaneseq
  %vm237 = vcmp.ge.s32.totalorder %v236, 0
  %vm238 = vcmp.lt.s32.totalorder %v236, 256
  %vm239 = vmand %vm237, %vm238
  %240 = vst.msk [vmem:[#allocation2] ss:$8 sm:$0x3] %vm239, 0.0
  %241 = vst.msk [vmem:[#allocation2] ss:$8 sm:$0x0] %vm239, 0.0
  %s242 = scalar_lea.vmem [#allocation2], 33
  %243 = vst.msk [vmem:[%s242] ss:$8 sm:$0x3] %vm239, 0.0
  %244 = vst.msk [vmem:[%s242] ss:$8 sm:$0x0] %vm239, 0.0
  %v245 = vld [vmem:[%s1] sm:$0xff]
  %v246 = vld [vmem:[%s1 + $0x8] sm:$0xff]
  %vm249 = vcmask 1040384
  %v250 = vrot.slane %v245, 7
  %v251 = vrot.slane %v246, 7
  %v252 = vsel %vm249, %v250, %v251
  %256 = vst [vmem:[#allocation2] sm:$0xfe] %v250
  %257 = vst [vmem:[#allocation2 + $0x10] sm:$0xff] %v252
  %258 = vst [vmem:[#allocation2 + $0x20] sm:$0x1] %v251
  %v261 = vrot.slane %v218, 7
  %v262 = vrot.slane %v223, 7
  %v263 = vsel %vm249, %v261, %v262
  %267 = vst [vmem:[#allocation2 + $0x8] sm:$0xfe] %v261
  %268 = vst [vmem:[#allocation2 + $0x18] sm:$0xff] %v263
  %269 = vst [vmem:[#allocation2 + $0x28] sm:$0x1] %v262
  %270 = vst [vmem:[#allocation3] sm:$0x1] 0.0
  %271 = vst [vmem:[#allocation3 + $0x11] sm:$0x1] 0.0
  %s272 = scalar_lea.vmem [#allocation2], 34
  %273 = vst.msk [vmem:[%s272] ss:$8 sm:$0x3] %vm239, 0.0
  %274 = vst.msk [vmem:[%s272] ss:$8 sm:$0x0] %vm239, 0.0
  %s275 = scalar_lea.vmem [#allocation2], 67
  %276 = vst.msk [vmem:[%s275] ss:$8 sm:$0x3] %vm239, 0.0
  %277 = vst.msk [vmem:[%s275] ss:$8 sm:$0x0] %vm239, 0.0
  %v278 = vld [vmem:[%s1 + $0x10] sm:$0xff]
  %v279 = vld [vmem:[%s1 + $0x18] sm:$0xff]
  %vm282 = vcmask 1042432
  %v283 = vrot.slane %v278, 5
  %v284 = vrot.slane %v279, 5
  %v285 = vsel %vm282, %v283, %v284
  %289 = vst [vmem:[#allocation2 + $0x20] sm:$0xf8] %v283
  %290 = vst [vmem:[#allocation2 + $0x30] sm:$0xff] %v285
  %291 = vst [vmem:[#allocation2 + $0x40] sm:$0x7] %v284
  %v294 = vrot.slane %v228, 5
  %v295 = vrot.slane %v233, 5
  %v296 = vsel %vm282, %v294, %v295
  %300 = vst [vmem:[#allocation2 + $0x28] sm:$0xf8] %v294
  %301 = vst [vmem:[#allocation2 + $0x38] sm:$0xff] %v296
  %302 = vst [vmem:[#allocation2 + $0x48] sm:$0x7] %v295
  %303 = vst [vmem:[#allocation3 + $0x12] sm:$0x1] 0.0
  %304 = vst [vmem:[#allocation3 + $0x23] sm:$0x1] 0.0
  %v305 = vld [vmem:[#allocation2] sm:$0xff]
  %v306 = vld [vmem:[#allocation2 + $0x8] sm:$0xff]
  %v307 = vld [vmem:[#allocation2 + $0x10] sm:$0xff]
  %v308 = vld [vmem:[#allocation2 + $0x18] sm:$0xff]
  %v309 = vld [vmem:[#allocation2] sm:$0xfe]
  %v310 = vld [vmem:[#allocation2 + $0x8] sm:$0xfe]
  %v311 = vld [vmem:[#allocation2 + $0x20] sm:$0x1]
  %v312 = vld [vmem:[#allocation2 + $0x28] sm:$0x1]
  %v313 = vld [vmem:[#allocation2] sm:$0xfc]
  %v314 = vld [vmem:[#allocation2 + $0x8] sm:$0xfc]
  %v315 = vld [vmem:[#allocation2 + $0x20] sm:$0x3]
  %v316 = vld [vmem:[#allocation2 + $0x28] sm:$0x3]
  %vm323 = vcmask 1046528
  %v324 = vrot.slane %v309, 1
  %v325 = vrot.slane %v307, 1
  %v326 = vsel %vm323, %v324, %v325
  %v327 = vrot.slane %v310, 1
  %v328 = vrot.slane %v308, 1
  %v329 = vsel %vm323, %v327, %v328
  %v330 = vrot.slane %v311, 1
  %v331 = vsel %vm323, %v325, %v330
  %v332 = vrot.slane %v312, 1
  %v333 = vsel %vm323, %v328, %v332
  %vm342 = vcmask 1045504
  %v343 = vrot.slane %v313, 2
  %v344 = vrot.slane %v307, 2
  %v345 = vsel %vm342, %v343, %v344
  %v346 = vrot.slane %v314, 2
  %v347 = vrot.slane %v308, 2
  %v348 = vsel %vm342, %v346, %v347
  %v349 = vrot.slane %v315, 2
  %v350 = vsel %vm342, %v344, %v349
  %v351 = vrot.slane %v316, 2
  %v352 = vsel %vm342, %v347, %v351
  %v357 = vld [vmem:[#allocation2 + $0x20] sm:$0xfc]
  %v358 = vld [vmem:[#allocation2 + $0x28] sm:$0xfc]
  %v359 = vld [vmem:[#allocation2 + $0x30] sm:$0xff]
  %v360 = vld [vmem:[#allocation2 + $0x38] sm:$0xff]
  %v361 = vld [vmem:[#allocation2 + $0x40] sm:$0x3]
  %v362 = vld [vmem:[#allocation2 + $0x48] sm:$0x3]
  %v363 = vld [vmem:[#allocation2 + $0x20] sm:$0xf8]
  %v364 = vld [vmem:[#allocation2 + $0x28] sm:$0xf8]
  %v365 = vld [vmem:[#allocation2 + $0x40] sm:$0x7]
  %v366 = vld [vmem:[#allocation2 + $0x48] sm:$0x7]
  %v367 = vld [vmem:[#allocation2 + $0x20] sm:$0xf0]
  %v368 = vld [vmem:[#allocation2 + $0x28] sm:$0xf0]
  %v369 = vld [vmem:[#allocation2 + $0x40] sm:$0xf]
  %v370 = vld [vmem:[#allocation2 + $0x48] sm:$0xf]
  %v377 = vrot.slane %v363, 1
  %v378 = vrot.slane %v359, 1
  %v379 = vsel %vm323, %v377, %v378
  %v380 = vrot.slane %v364, 1
  %v381 = vrot.slane %v360, 1
  %v382 = vsel %vm323, %v380, %v381
  %v383 = vrot.slane %v365, 1
  %v384 = vsel %vm323, %v378, %v383
  %v385 = vrot.slane %v366, 1
  %v386 = vsel %vm323, %v381, %v385
  %v391 = vrot.slane %v367, 2
  %v392 = vrot.slane %v359, 2
  %v393 = vsel %vm342, %v391, %v392
  %v394 = vrot.slane %v368, 2
  %v395 = vrot.slane %v360, 2
  %v396 = vsel %vm342, %v394, %v395
  %v397 = vrot.slane %v369, 2
  %v398 = vsel %vm342, %v392, %v397
  %v399 = vrot.slane %v370, 2
  %v400 = vsel %vm342, %v395, %v399
  %v405 = vrot.slane %v357, 2
  %v406 = vsel %vm342, %v405, %v392
  %v407 = vrot.slane %v358, 2
  %v408 = vsel %vm342, %v407, %v395
  %v409 = vrot.slane %v379, 2
  %v410 = vrot.slane %v384, 2
  %v411 = vsel %vm342, %v409, %v410
  %v412 = vrot.slane %v382, 2
  %v413 = vrot.slane %v386, 2
  %v414 = vsel %vm342, %v412, %v413
  %v415 = vrot.slane %v393, 2
  %v416 = vrot.slane %v398, 2
  %v417 = vsel %vm342, %v415, %v416
  %v418 = vrot.slane %v396, 2
  %v419 = vrot.slane %v400, 2
  %v420 = vsel %vm342, %v418, %v419
  %v421 = vrot.slane %v361, 2
  %v422 = vsel %vm342, %v392, %v421
  %v423 = vrot.slane %v362, 2
  %v424 = vsel %vm342, %v395, %v423
  %v425 = vrot.slane %v383, 2
  %v426 = vsel %vm342, %v410, %v425
  %v427 = vrot.slane %v385, 2
  %v428 = vsel %vm342, %v413, %v427
  %v429 = vrot.slane %v397, 2
  %v430 = vsel %vm342, %v416, %v429
  %v431 = vrot.slane %v399, 2
  %v432 = vsel %vm342, %v419, %v431
  %v445 = vpack.c.bf16 %v307, %v305
  %v446 = vpack.c.bf16 %v308, %v306
  %v447 = vpack.c.bf16 %v331, %v326
  %v448 = vpack.c.bf16 %v333, %v329
  %v449 = vpack.c.bf16 %v350, %v345
  %v450 = vpack.c.bf16 %v352, %v348
  %v451 = vpack.c.bf16 %v422, %v406
  %v452 = vpack.c.bf16 %v424, %v408
  %v453 = vpack.c.bf16 %v426, %v411
  %v454 = vpack.c.bf16 %v428, %v414
  %v455 = vpack.c.bf16 %v430, %v417
  %v456 = vpack.c.bf16 %v432, %v420
  %v457 = vld [vmem:[%s5] sm:$0xf]
  %v458 = vld [vmem:[%s5 + $0x4] sm:$0xf]
  %v459 = vld [vmem:[%s5 + $0x8] sm:$0xf]
  %v460 = vld [vmem:[%s5 + $0xc] sm:$0xf]
  %v461 = vld [vmem:[%s5 + $0x10] sm:$0xf]
  %v462 = vld [vmem:[%s5 + $0x14] sm:$0xf]
  %v463 = vld [vmem:[%s5 + $0x18] sm:$0xf]
  %v464 = vld [vmem:[%s5 + $0x1c] sm:$0xf]
  %v465 = vld [vmem:[%s5 + $0x20] sm:$0xf]
  %v466 = vld [vmem:[%s5 + $0x24] sm:$0xf]
  %v467 = vld [vmem:[%s5 + $0x28] sm:$0xf]
  %v468 = vld [vmem:[%s5 + $0x2c] sm:$0xf]
  %v469 = vld [vmem:[%s5 + $0x30] sm:$0xf]
  %v470 = vld [vmem:[%s5 + $0x34] sm:$0xf]
  %v471 = vld [vmem:[%s5 + $0x38] sm:$0xf]
  %v472 = vld [vmem:[%s5 + $0x3c] sm:$0xf]
  %v473 = vld [vmem:[%s5 + $0x40] sm:$0xf]
  %v474 = vld [vmem:[%s5 + $0x44] sm:$0xf]
  %v475 = vld [vmem:[%s5 + $0x48] sm:$0xf]
  %v476 = vld [vmem:[%s5 + $0x4c] sm:$0xf]
  %v477 = vld [vmem:[%s5 + $0x50] sm:$0xf]
  %v478 = vld [vmem:[%s5 + $0x54] sm:$0xf]
  %v479 = vld [vmem:[%s5 + $0x58] sm:$0xf]
  %v480 = vld [vmem:[%s5 + $0x5c] sm:$0xf]
  %v481 = vld [vmem:[%s5 + $0x60] sm:$0xf]
  %v482 = vld [vmem:[%s5 + $0x64] sm:$0xf]
  %v483 = vld [vmem:[%s5 + $0x68] sm:$0xf]
  %v484 = vld [vmem:[%s5 + $0x6c] sm:$0xf]
  %v485 = vld [vmem:[%s5 + $0x70] sm:$0xf]
  %v486 = vld [vmem:[%s5 + $0x74] sm:$0xf]
  %v487 = vld [vmem:[%s5 + $0x78] sm:$0xf]
  %v488 = vld [vmem:[%s5 + $0x7c] sm:$0xf]
  %v489 = vld [vmem:[%s5 + $0x80] sm:$0xf]
  %v490 = vld [vmem:[%s5 + $0x84] sm:$0xf]
  %v491 = vld [vmem:[%s5 + $0x88] sm:$0xf]
  %v492 = vld [vmem:[%s5 + $0x8c] sm:$0xf]
  %v493 = vld [vmem:[%s5 + $0x90] sm:$0xf]
  %v494 = vld [vmem:[%s5 + $0x94] sm:$0xf]
  %v495 = vld [vmem:[%s5 + $0x98] sm:$0xf]
  %v496 = vld [vmem:[%s5 + $0x9c] sm:$0xf]
  %v497 = vld [vmem:[%s5 + $0xa0] sm:$0xf]
  %v498 = vld [vmem:[%s5 + $0xa4] sm:$0xf]
  %v499 = vld [vmem:[%s5 + $0xa8] sm:$0xf]
  %v500 = vld [vmem:[%s5 + $0xac] sm:$0xf]
  %v501 = vld [vmem:[%s5 + $0xb0] sm:$0xf]
  %v502 = vld [vmem:[%s5 + $0xb4] sm:$0xf]
  %v503 = vld [vmem:[%s5 + $0xb8] sm:$0xf]
  %v504 = vld [vmem:[%s5 + $0xbc] sm:$0xf]
  %v505 = vld [vmem:[%s5 + $0xc0] sm:$0xf]
  %v506 = vld [vmem:[%s5 + $0xc4] sm:$0xf]
  %v507 = vld [vmem:[%s5 + $0xc8] sm:$0xf]
  %v508 = vld [vmem:[%s5 + $0xcc] sm:$0xf]
  %v509 = vld [vmem:[%s5 + $0xd0] sm:$0xf]
  %v510 = vld [vmem:[%s5 + $0xd4] sm:$0xf]
  %v511 = vld [vmem:[%s5 + $0xd8] sm:$0xf]
  %v512 = vld [vmem:[%s5 + $0xdc] sm:$0xf]
  %v513 = vld [vmem:[%s5 + $0xe0] sm:$0xf]
  %v514 = vld [vmem:[%s5 + $0xe4] sm:$0xf]
  %v515 = vld [vmem:[%s5 + $0xe8] sm:$0xf]
  %v516 = vld [vmem:[%s5 + $0xec] sm:$0xf]
  %v517 = vld [vmem:[%s5 + $0xf0] sm:$0xf]
  %v518 = vld [vmem:[%s5 + $0xf4] sm:$0xf]
  %v519 = vld [vmem:[%s5 + $0xf8] sm:$0xf]
  %v520 = vld [vmem:[%s5 + $0xfc] sm:$0xf]
  %v521 = vld [vmem:[%s5 + $0x100] sm:$0xf]
  %v522 = vld [vmem:[%s5 + $0x104] sm:$0xf]
  %v523 = vld [vmem:[%s5 + $0x108] sm:$0xf]
  %v524 = vld [vmem:[%s5 + $0x10c] sm:$0xf]
  %v525 = vld [vmem:[%s5 + $0x110] sm:$0xf]
  %v526 = vld [vmem:[%s5 + $0x114] sm:$0xf]
  %v527 = vld [vmem:[%s5 + $0x118] sm:$0xf]
  %v528 = vld [vmem:[%s5 + $0x11c] sm:$0xf]
  %v529 = vld [vmem:[%s5 + $0x120] sm:$0xf]
  %v530 = vld [vmem:[%s5 + $0x124] sm:$0xf]
  %v531 = vld [vmem:[%s5 + $0x128] sm:$0xf]
  %v532 = vld [vmem:[%s5 + $0x12c] sm:$0xf]
  %v533 = vld [vmem:[%s5 + $0x130] sm:$0xf]
  %v534 = vld [vmem:[%s5 + $0x134] sm:$0xf]
  %v535 = vld [vmem:[%s5 + $0x138] sm:$0xf]
  %v536 = vld [vmem:[%s5 + $0x13c] sm:$0xf]
  %v537 = vld [vmem:[%s5 + $0x140] sm:$0xf]
  %v538 = vld [vmem:[%s5 + $0x144] sm:$0xf]
  %v539 = vld [vmem:[%s5 + $0x148] sm:$0xf]
  %v540 = vld [vmem:[%s5 + $0x14c] sm:$0xf]
  %v541 = vld [vmem:[%s5 + $0x150] sm:$0xf]
  %v542 = vld [vmem:[%s5 + $0x154] sm:$0xf]
  %v543 = vld [vmem:[%s5 + $0x158] sm:$0xf]
  %v544 = vld [vmem:[%s5 + $0x15c] sm:$0xf]
  %v545 = vld [vmem:[%s5 + $0x160] sm:$0xf]
  %v546 = vld [vmem:[%s5 + $0x164] sm:$0xf]
  %v547 = vld [vmem:[%s5 + $0x168] sm:$0xf]
  %v548 = vld [vmem:[%s5 + $0x16c] sm:$0xf]
  %v549 = vld [vmem:[%s5 + $0x170] sm:$0xf]
  %v550 = vld [vmem:[%s5 + $0x174] sm:$0xf]
  %v551 = vld [vmem:[%s5 + $0x178] sm:$0xf]
  %v552 = vld [vmem:[%s5 + $0x17c] sm:$0xf]
  %v649 = vunpack.c.l.b16 %v457
  %v650 = vunpack.c.l.b16 %v458
  %v651 = vunpack.c.l.b16 %v459
  %v652 = vunpack.c.l.b16 %v460
  %v653 = vunpack.c.l.b16 %v461
  %v654 = vunpack.c.l.b16 %v462
  %v655 = vunpack.c.l.b16 %v463
  %v656 = vunpack.c.l.b16 %v464
  %v657 = vunpack.c.l.b16 %v465
  %v658 = vunpack.c.l.b16 %v466
  %v659 = vunpack.c.l.b16 %v467
  %v660 = vunpack.c.l.b16 %v468
  %v661 = vunpack.c.l.b16 %v469
  %v662 = vunpack.c.l.b16 %v470
  %v663 = vunpack.c.l.b16 %v471
  %v664 = vunpack.c.l.b16 %v472
  %v665 = vunpack.c.l.b16 %v473
  %v666 = vunpack.c.l.b16 %v474
  %v667 = vunpack.c.l.b16 %v475
  %v668 = vunpack.c.l.b16 %v476
  %v669 = vunpack.c.l.b16 %v477
  %v670 = vunpack.c.l.b16 %v478
  %v671 = vunpack.c.l.b16 %v479
  %v672 = vunpack.c.l.b16 %v480
  %v673 = vunpack.c.l.b16 %v481
  %v674 = vunpack.c.l.b16 %v482
  %v675 = vunpack.c.l.b16 %v483
  %v676 = vunpack.c.l.b16 %v484
  %v677 = vunpack.c.l.b16 %v485
  %v678 = vunpack.c.l.b16 %v486
  %v679 = vunpack.c.l.b16 %v487
  %v680 = vunpack.c.l.b16 %v488
  %v681 = vunpack.c.l.b16 %v489
  %v682 = vunpack.c.l.b16 %v490
  %v683 = vunpack.c.l.b16 %v491
  %v684 = vunpack.c.l.b16 %v492
  %v685 = vunpack.c.l.b16 %v493
  %v686 = vunpack.c.l.b16 %v494
  %v687 = vunpack.c.l.b16 %v495
  %v688 = vunpack.c.l.b16 %v496
  %v689 = vunpack.c.l.b16 %v497
  %v690 = vunpack.c.l.b16 %v498
  %v691 = vunpack.c.l.b16 %v499
  %v692 = vunpack.c.l.b16 %v500
  %v693 = vunpack.c.l.b16 %v501
  %v694 = vunpack.c.l.b16 %v502
  %v695 = vunpack.c.l.b16 %v503
  %v696 = vunpack.c.l.b16 %v504
  %v697 = vunpack.c.l.b16 %v505
  %v698 = vunpack.c.l.b16 %v506
  %v699 = vunpack.c.l.b16 %v507
  %v700 = vunpack.c.l.b16 %v508
  %v701 = vunpack.c.l.b16 %v509
  %v702 = vunpack.c.l.b16 %v510
  %v703 = vunpack.c.l.b16 %v511
  %v704 = vunpack.c.l.b16 %v512
  %v705 = vunpack.c.l.b16 %v513
  %v706 = vunpack.c.l.b16 %v514
  %v707 = vunpack.c.l.b16 %v515
  %v708 = vunpack.c.l.b16 %v516
  %v709 = vunpack.c.l.b16 %v517
  %v710 = vunpack.c.l.b16 %v518
  %v711 = vunpack.c.l.b16 %v519
  %v712 = vunpack.c.l.b16 %v520
  %v713 = vunpack.c.l.b16 %v521
  %v714 = vunpack.c.l.b16 %v522
  %v715 = vunpack.c.l.b16 %v523
  %v716 = vunpack.c.l.b16 %v524
  %v717 = vunpack.c.l.b16 %v525
  %v718 = vunpack.c.l.b16 %v526
  %v719 = vunpack.c.l.b16 %v527
  %v720 = vunpack.c.l.b16 %v528
  %v721 = vunpack.c.l.b16 %v529
  %v722 = vunpack.c.l.b16 %v530
  %v723 = vunpack.c.l.b16 %v531
  %v724 = vunpack.c.l.b16 %v532
  %v725 = vunpack.c.l.b16 %v533
  %v726 = vunpack.c.l.b16 %v534
  %v727 = vunpack.c.l.b16 %v535
  %v728 = vunpack.c.l.b16 %v536
  %v729 = vunpack.c.l.b16 %v537
  %v730 = vunpack.c.l.b16 %v538
  %v731 = vunpack.c.l.b16 %v539
  %v732 = vunpack.c.l.b16 %v540
  %v733 = vunpack.c.l.b16 %v541
  %v734 = vunpack.c.l.b16 %v542
  %v735 = vunpack.c.l.b16 %v543
  %v736 = vunpack.c.l.b16 %v544
  %v737 = vunpack.c.l.b16 %v545
  %v738 = vunpack.c.l.b16 %v546
  %v739 = vunpack.c.l.b16 %v547
  %v740 = vunpack.c.l.b16 %v548
  %v741 = vunpack.c.l.b16 %v549
  %v742 = vunpack.c.l.b16 %v550
  %v743 = vunpack.c.l.b16 %v551
  %v744 = vunpack.c.l.b16 %v552
  %v745 = vpack.c.b16 %v650, %v649
  %v746 = vpack.c.b16 %v652, %v651
  %v747 = vpack.c.b16 %v654, %v653
  %v748 = vpack.c.b16 %v656, %v655
  %v749 = vpack.c.b16 %v658, %v657
  %v750 = vpack.c.b16 %v660, %v659
  %v751 = vpack.c.b16 %v662, %v661
  %v752 = vpack.c.b16 %v664, %v663
  %v753 = vpack.c.b16 %v666, %v665
  %v754 = vpack.c.b16 %v668, %v667
  %v755 = vpack.c.b16 %v670, %v669
  %v756 = vpack.c.b16 %v672, %v671
  %v757 = vpack.c.b16 %v674, %v673
  %v758 = vpack.c.b16 %v676, %v675
  %v759 = vpack.c.b16 %v678, %v677
  %v760 = vpack.c.b16 %v680, %v679
  %v761 = vpack.c.b16 %v682, %v681
  %v762 = vpack.c.b16 %v684, %v683
  %v763 = vpack.c.b16 %v686, %v685
  %v764 = vpack.c.b16 %v688, %v687
  %v765 = vpack.c.b16 %v690, %v689
  %v766 = vpack.c.b16 %v692, %v691
  %v767 = vpack.c.b16 %v694, %v693
  %v768 = vpack.c.b16 %v696, %v695
  %v769 = vpack.c.b16 %v698, %v697
  %v770 = vpack.c.b16 %v700, %v699
  %v771 = vpack.c.b16 %v702, %v701
  %v772 = vpack.c.b16 %v704, %v703
  %v773 = vpack.c.b16 %v706, %v705
  %v774 = vpack.c.b16 %v708, %v707
  %v775 = vpack.c.b16 %v710, %v709
  %v776 = vpack.c.b16 %v712, %v711
  %v777 = vpack.c.b16 %v714, %v713
  %v778 = vpack.c.b16 %v716, %v715
  %v779 = vpack.c.b16 %v718, %v717
  %v780 = vpack.c.b16 %v720, %v719
  %v781 = vpack.c.b16 %v722, %v721
  %v782 = vpack.c.b16 %v724, %v723
  %v783 = vpack.c.b16 %v726, %v725
  %v784 = vpack.c.b16 %v728, %v727
  %v785 = vpack.c.b16 %v730, %v729
  %v786 = vpack.c.b16 %v732, %v731
  %v787 = vpack.c.b16 %v734, %v733
  %v788 = vpack.c.b16 %v736, %v735
  %v789 = vpack.c.b16 %v738, %v737
  %v790 = vpack.c.b16 %v740, %v739
  %v791 = vpack.c.b16 %v742, %v741
  %v792 = vpack.c.b16 %v744, %v743
  %841 = vmatprep.subr.bf16.mxu0 0
  %842 = vmatpush1.bf16.msra.mxu0 %v745
  %843 = vmatprep.subr.bf16.mxu0 0
  %844 = vmatpush1.bf16.msra.mxu0 %v746
  %845 = vmatprep.subr.bf16.mxu0 0
  %846 = vmatpush1.bf16.msra.mxu0 %v747
  %847 = vmatprep.subr.bf16.mxu0 0
  %848 = vmatpush1.bf16.msra.mxu0 %v748
  %849 = vmatprep.subr.bf16.mxu0 0
  %850 = vmatpush1.bf16.msra.mxu0 %v749
  %851 = vmatprep.subr.bf16.mxu0 0
  %852 = vmatpush1.bf16.msra.mxu0 %v750
  %853 = vmatprep.subr.bf16.mxu0 0
  %854 = vmatpush1.bf16.msra.mxu0 %v751
  %855 = vmatprep.subr.bf16.mxu0 0
  %856 = vmatpush1.bf16.msra.mxu0 %v752
  %857 = vmatprep.subr.bf16.mxu0 0
  %858 = vmatpush1.bf16.msra.mxu0 %v753
  %859 = vmatprep.subr.bf16.mxu0 0
  %860 = vmatpush1.bf16.msra.mxu0 %v754
  %861 = vmatprep.subr.bf16.mxu0 0
  %862 = vmatpush1.bf16.msra.mxu0 %v755
  %863 = vmatprep.subr.bf16.mxu0 0
  %864 = vmatpush1.bf16.msra.mxu0 %v756
  %865 = vmatprep.subr.bf16.mxu0 0
  %866 = vmatpush1.bf16.msra.mxu0 %v757
  %867 = vmatprep.subr.bf16.mxu0 0
  %868 = vmatpush1.bf16.msra.mxu0 %v758
  %869 = vmatprep.subr.bf16.mxu0 0
  %870 = vmatpush1.bf16.msra.mxu0 %v759
  %871 = vmatprep.subr.bf16.mxu0 0
  %872 = vmatpush1.bf16.msra.mxu0 %v760
  %873 = vmatprep.mubr.bf16.mxu0 %v446
  %874 = vmatmul.mubr.bf16.gmra.mrb[0].mxu0 %v445
  %v875 = vpop.f32.mrb[0].mxu0
  %v876 = vadd.f32 0.0, %v875
  %v877 = vpop.f32.mrb[0].mxu0
  %v878 = vpop.f32.mrb[0].mxu0
  %v879 = vadd.f32 0.0, %v878
  %v880 = vpop.f32.mrb[0].mxu0
  %881 = vmatprep.mubr.bf16.mxu0 %v452
  %882 = vmatmul.mubr.bf16.gmra.mrb[0].mxu0 %v451
  %v883 = vpop.f32.mrb[0].mxu0
  %v884 = vadd.f32 0.0, %v883
  %v885 = vpop.f32.mrb[0].mxu0
  %v886 = vpop.f32.mrb[0].mxu0
  %v887 = vadd.f32 0.0, %v886
  %v888 = vpop.f32.mrb[0].mxu0
  %889 = vdwg.mxu0
  %890 = vmatprep.subr.bf16.mxu0 0
  %891 = vmatpush1.bf16.msra.mxu0 %v761
  %892 = vmatprep.subr.bf16.mxu0 0
  %893 = vmatpush1.bf16.msra.mxu0 %v762
  %894 = vmatprep.subr.bf16.mxu0 0
  %895 = vmatpush1.bf16.msra.mxu0 %v763
  %896 = vmatprep.subr.bf16.mxu0 0
  %897 = vmatpush1.bf16.msra.mxu0 %v764
  %898 = vmatprep.subr.bf16.mxu0 0
  %899 = vmatpush1.bf16.msra.mxu0 %v765
  %900 = vmatprep.subr.bf16.mxu0 0
  %901 = vmatpush1.bf16.msra.mxu0 %v766
  %902 = vmatprep.subr.bf16.mxu0 0
  %903 = vmatpush1.bf16.msra.mxu0 %v767
  %904 = vmatprep.subr.bf16.mxu0 0
  %905 = vmatpush1.bf16.msra.mxu0 %v768
  %906 = vmatprep.subr.bf16.mxu0 0
  %907 = vmatpush1.bf16.msra.mxu0 %v769
  %908 = vmatprep.subr.bf16.mxu0 0
  %909 = vmatpush1.bf16.msra.mxu0 %v770
  %910 = vmatprep.subr.bf16.mxu0 0
  %911 = vmatpush1.bf16.msra.mxu0 %v771
  %912 = vmatprep.subr.bf16.mxu0 0
  %913 = vmatpush1.bf16.msra.mxu0 %v772
  %914 = vmatprep.subr.bf16.mxu0 0
  %915 = vmatpush1.bf16.msra.mxu0 %v773
  %916 = vmatprep.subr.bf16.mxu0 0
  %917 = vmatpush1.bf16.msra.mxu0 %v774
  %918 = vmatprep.subr.bf16.mxu0 0
  %919 = vmatpush1.bf16.msra.mxu0 %v775
  %920 = vmatprep.subr.bf16.mxu0 0
  %921 = vmatpush1.bf16.msra.mxu0 %v776
  %922 = vmatprep.mubr.bf16.mxu0 %v448
  %923 = vmatmul.mubr.bf16.gmra.mrb[0].mxu0 %v447
  %v924 = vpop.f32.mrb[0].mxu0
  %v925 = vadd.f32 %v876, %v924
  %v926 = vpop.f32.mrb[0].mxu0
  %v927 = vpop.f32.mrb[0].mxu0
  %v928 = vadd.f32 %v879, %v927
  %v929 = vpop.f32.mrb[0].mxu0
  %930 = vmatprep.mubr.bf16.mxu0 %v454
  %931 = vmatmul.mubr.bf16.gmra.mrb[0].mxu0 %v453
  %v932 = vpop.f32.mrb[0].mxu0
  %v933 = vadd.f32 %v884, %v932
  %v934 = vpop.f32.mrb[0].mxu0
  %v935 = vpop.f32.mrb[0].mxu0
  %v936 = vadd.f32 %v887, %v935
  %v937 = vpop.f32.mrb[0].mxu0
  %938 = vdwg.mxu0
  %939 = vmatprep.subr.bf16.mxu0 0
  %940 = vmatpush1.bf16.msra.mxu0 %v777
  %941 = vmatprep.subr.bf16.mxu0 0
  %942 = vmatpush1.bf16.msra.mxu0 %v778
  %943 = vmatprep.subr.bf16.mxu0 0
  %944 = vmatpush1.bf16.msra.mxu0 %v779
  %945 = vmatprep.subr.bf16.mxu0 0
  %946 = vmatpush1.bf16.msra.mxu0 %v780
  %947 = vmatprep.subr.bf16.mxu0 0
  %948 = vmatpush1.bf16.msra.mxu0 %v781
  %949 = vmatprep.subr.bf16.mxu0 0
  %950 = vmatpush1.bf16.msra.mxu0 %v782
  %951 = vmatprep.subr.bf16.mxu0 0
  %952 = vmatpush1.bf16.msra.mxu0 %v783
  %953 = vmatprep.subr.bf16.mxu0 0
  %954 = vmatpush1.bf16.msra.mxu0 %v784
  %955 = vmatprep.subr.bf16.mxu0 0
  %956 = vmatpush1.bf16.msra.mxu0 %v785
  %957 = vmatprep.subr.bf16.mxu0 0
  %958 = vmatpush1.bf16.msra.mxu0 %v786
  %959 = vmatprep.subr.bf16.mxu0 0
  %960 = vmatpush1.bf16.msra.mxu0 %v787
  %961 = vmatprep.subr.bf16.mxu0 0
  %962 = vmatpush1.bf16.msra.mxu0 %v788
  %963 = vmatprep.subr.bf16.mxu0 0
  %964 = vmatpush1.bf16.msra.mxu0 %v789
  %965 = vmatprep.subr.bf16.mxu0 0
  %966 = vmatpush1.bf16.msra.mxu0 %v790
  %967 = vmatprep.subr.bf16.mxu0 0
  %968 = vmatpush1.bf16.msra.mxu0 %v791
  %969 = vmatprep.subr.bf16.mxu0 0
  %970 = vmatpush1.bf16.msra.mxu0 %v792
  %971 = vmatprep.mubr.bf16.mxu0 %v450
  %972 = vmatmul.mubr.bf16.gmra.mrb[0].mxu0 %v449
  %v973 = vpop.f32.mrb[0].mxu0
  %v974 = vadd.f32 %v925, %v973
  %v975 = vpop.f32.mrb[0].mxu0
  %v976 = vpop.f32.mrb[0].mxu0
  %v977 = vadd.f32 %v928, %v976
  %v978 = vpop.f32.mrb[0].mxu0
  %979 = vmatprep.mubr.bf16.mxu0 %v456
  %980 = vmatmul.mubr.bf16.gmra.mrb[0].mxu0 %v455
  %v981 = vpop.f32.mrb[0].mxu0
  %v982 = vadd.f32 %v933, %v981
  %v983 = vpop.f32.mrb[0].mxu0
  %v984 = vpop.f32.mrb[0].mxu0
  %v985 = vadd.f32 %v936, %v984
  %v986 = vpop.f32.mrb[0].mxu0
  %987 = vdwg.mxu0
  %v988 = vld [vmem:[%s6] sm:$0x1]
  %v990 = vlaneseq
  %v991 = vshrl.u32 %v990, 7
  %v992 = vsub.s32 0, %v991
  %v993 = vrot.slane %v988, %v992
  %v995 = vmul.f32 %v974, %v993
  %v996 = vmul.f32 %v977, %v993
  %v997 = vmul.f32 %v982, %v993
  %v998 = vmul.f32 %v985, %v993
  %v999 = vld [vmem:[%s7] sm:$0x1]
  %v1001 = vlaneseq
  %v1002 = vshrl.u32 %v1001, 7
  %v1003 = vsub.s32 0, %v1002
  %v1004 = vrot.slane %v999, %v1003
  %v1006 = vadd.f32 %v995, %v1004
  %v1007 = vadd.f32 %v996, %v1004
  %v1008 = vadd.f32 %v997, %v1004
  %v1009 = vadd.f32 %v998, %v1004
  %v1010 = vmul.f32 %v1006, 0.5
  %v1011 = vmul.f32 %v1007, 0.5
  %v1012 = vmul.f32 %v1008, 0.5
  %v1013 = vmul.f32 %v1009, 0.5
  %v1014 = vrcp.pop 1.4142135
  %v1015 = vmul.f32 %v1006, %v1014
  %v1016 = vmul.f32 %v1007, %v1014
  %v1017 = vmul.f32 %v1008, %v1014
  %v1018 = vmul.f32 %v1009, %v1014
  %v1019 = verf.f32.pop %v1015
  %v1020 = verf.f32.pop %v1016
  %v1021 = verf.f32.pop %v1017
  %v1022 = verf.f32.pop %v1018
  %v1023 = vadd.f32 %v1019, 1.0
  %v1024 = vadd.f32 %v1020, 1.0
  %v1025 = vadd.f32 %v1021, 1.0
  %v1026 = vadd.f32 %v1022, 1.0
  %v1027 = vmul.f32 %v1010, %v1023
  %v1028 = vmul.f32 %v1011, %v1024
  %v1029 = vmul.f32 %v1012, %v1025
  %v1030 = vmul.f32 %v1013, %v1026
  %1031 = vst [vmem:[#allocation3 + $0x1] sm:$0xff] %v1027
  %1032 = vst [vmem:[#allocation3 + $0x9] sm:$0xff] %v1028
  %1033 = vst [vmem:[#allocation3 + $0x13] sm:$0xff] %v1029
  %1034 = vst [vmem:[#allocation3 + $0x1b] sm:$0xff] %v1030
  %v1035 = vld [vmem:[#allocation3] sm:$0xff]
  %v1036 = vld [vmem:[#allocation3 + $0x8] sm:$0xff]
  %v1037 = vld [vmem:[#allocation3 + $0x1] sm:$0xff]
  %v1038 = vld [vmem:[#allocation3 + $0x9] sm:$0xff]
  %v1039 = vld [vmem:[#allocation3 + $0x2] sm:$0xff]
  %v1040 = vld [vmem:[#allocation3 + $0xa] sm:$0xff]
  %v1041 = vld [vmem:[#allocation3 + $0x12] sm:$0xff]
  %v1042 = vld [vmem:[#allocation3 + $0x1a] sm:$0xff]
  %v1043 = vld [vmem:[#allocation3 + $0x13] sm:$0xff]
  %v1044 = vld [vmem:[#allocation3 + $0x1b] sm:$0xff]
  %v1045 = vld [vmem:[#allocation3 + $0x14] sm:$0xff]
  %v1046 = vld [vmem:[#allocation3 + $0x1c] sm:$0xff]
  %v1047 = vpack.c.bf16 %v1036, %v1035
  %v1048 = vpack.c.bf16 %v1038, %v1037
  %v1049 = vpack.c.bf16 %v1040, %v1039
  %v1050 = vpack.c.bf16 %v1042, %v1041
  %v1051 = vpack.c.bf16 %v1044, %v1043
  %v1052 = vpack.c.bf16 %v1046, %v1045
  %v1053 = vld [vmem:[%s8] sm:$0xf]
  %v1054 = vld [vmem:[%s8 + $0x4] sm:$0xf]
  %v1055 = vld [vmem:[%s8 + $0x8] sm:$0xf]
  %v1056 = vld [vmem:[%s8 + $0xc] sm:$0xf]
  %v1057 = vld [vmem:[%s8 + $0x10] sm:$0xf]
  %v1058 = vld [vmem:[%s8 + $0x14] sm:$0xf]
  %v1059 = vld [vmem:[%s8 + $0x18] sm:$0xf]
  %v1060 = vld [vmem:[%s8 + $0x1c] sm:$0xf]
  %v1061 = vld [vmem:[%s8 + $0x20] sm:$0xf]
  %v1062 = vld [vmem:[%s8 + $0x24] sm:$0xf]
  %v1063 = vld [vmem:[%s8 + $0x28] sm:$0xf]
  %v1064 = vld [vmem:[%s8 + $0x2c] sm:$0xf]
  %v1065 = vld [vmem:[%s8 + $0x30] sm:$0xf]
  %v1066 = vld [vmem:[%s8 + $0x34] sm:$0xf]
  %v1067 = vld [vmem:[%s8 + $0x38] sm:$0xf]
  %v1068 = vld [vmem:[%s8 + $0x3c] sm:$0xf]
  %v1069 = vld [vmem:[%s8 + $0x40] sm:$0xf]
  %v1070 = vld [vmem:[%s8 + $0x44] sm:$0xf]
  %v1071 = vld [vmem:[%s8 + $0x48] sm:$0xf]
  %v1072 = vld [vmem:[%s8 + $0x4c] sm:$0xf]
  %v1073 = vld [vmem:[%s8 + $0x50] sm:$0xf]
  %v1074 = vld [vmem:[%s8 + $0x54] sm:$0xf]
  %v1075 = vld [vmem:[%s8 + $0x58] sm:$0xf]
  %v1076 = vld [vmem:[%s8 + $0x5c] sm:$0xf]
  %v1077 = vld [vmem:[%s8 + $0x60] sm:$0xf]
  %v1078 = vld [vmem:[%s8 + $0x64] sm:$0xf]
  %v1079 = vld [vmem:[%s8 + $0x68] sm:$0xf]
  %v1080 = vld [vmem:[%s8 + $0x6c] sm:$0xf]
  %v1081 = vld [vmem:[%s8 + $0x70] sm:$0xf]
  %v1082 = vld [vmem:[%s8 + $0x74] sm:$0xf]
  %v1083 = vld [vmem:[%s8 + $0x78] sm:$0xf]
  %v1084 = vld [vmem:[%s8 + $0x7c] sm:$0xf]
  %v1085 = vld [vmem:[%s8 + $0x80] sm:$0xf]
  %v1086 = vld [vmem:[%s8 + $0x84] sm:$0xf]
  %v1087 = vld [vmem:[%s8 + $0x88] sm:$0xf]
  %v1088 = vld [vmem:[%s8 + $0x8c] sm:$0xf]
  %v1089 = vld [vmem:[%s8 + $0x90] sm:$0xf]
  %v1090 = vld [vmem:[%s8 + $0x94] sm:$0xf]
  %v1091 = vld [vmem:[%s8 + $0x98] sm:$0xf]
  %v1092 = vld [vmem:[%s8 + $0x9c] sm:$0xf]
  %v1093 = vld [vmem:[%s8 + $0xa0] sm:$0xf]
  %v1094 = vld [vmem:[%s8 + $0xa4] sm:$0xf]
  %v1095 = vld [vmem:[%s8 + $0xa8] sm:$0xf]
  %v1096 = vld [vmem:[%s8 + $0xac] sm:$0xf]
  %v1097 = vld [vmem:[%s8 + $0xb0] sm:$0xf]
  %v1098 = vld [vmem:[%s8 + $0xb4] sm:$0xf]
  %v1099 = vld [vmem:[%s8 + $0xb8] sm:$0xf]
  %v1100 = vld [vmem:[%s8 + $0xbc] sm:$0xf]
  %v1149 = vunpack.c.l.b16 %v1053
  %v1150 = vunpack.c.l.b16 %v1054
  %v1151 = vunpack.c.l.b16 %v1055
  %v1152 = vunpack.c.l.b16 %v1056
  %v1153 = vunpack.c.l.b16 %v1057
  %v1154 = vunpack.c.l.b16 %v1058
  %v1155 = vunpack.c.l.b16 %v1059
  %v1156 = vunpack.c.l.b16 %v1060
  %v1157 = vunpack.c.l.b16 %v1061
  %v1158 = vunpack.c.l.b16 %v1062
  %v1159 = vunpack.c.l.b16 %v1063
  %v1160 = vunpack.c.l.b16 %v1064
  %v1161 = vunpack.c.l.b16 %v1065
  %v1162 = vunpack.c.l.b16 %v1066
  %v1163 = vunpack.c.l.b16 %v1067
  %v1164 = vunpack.c.l.b16 %v1068
  %v1165 = vunpack.c.l.b16 %v1069
  %v1166 = vunpack.c.l.b16 %v1070
  %v1167 = vunpack.c.l.b16 %v1071
  %v1168 = vunpack.c.l.b16 %v1072
  %v1169 = vunpack.c.l.b16 %v1073
  %v1170 = vunpack.c.l.b16 %v1074
  %v1171 = vunpack.c.l.b16 %v1075
  %v1172 = vunpack.c.l.b16 %v1076
  %v1173 = vunpack.c.l.b16 %v1077
  %v1174 = vunpack.c.l.b16 %v1078
  %v1175 = vunpack.c.l.b16 %v1079
  %v1176 = vunpack.c.l.b16 %v1080
  %v1177 = vunpack.c.l.b16 %v1081
  %v1178 = vunpack.c.l.b16 %v1082
  %v1179 = vunpack.c.l.b16 %v1083
  %v1180 = vunpack.c.l.b16 %v1084
  %v1181 = vunpack.c.l.b16 %v1085
  %v1182 = vunpack.c.l.b16 %v1086
  %v1183 = vunpack.c.l.b16 %v1087
  %v1184 = vunpack.c.l.b16 %v1088
  %v1185 = vunpack.c.l.b16 %v1089
  %v1186 = vunpack.c.l.b16 %v1090
  %v1187 = vunpack.c.l.b16 %v1091
  %v1188 = vunpack.c.l.b16 %v1092
  %v1189 = vunpack.c.l.b16 %v1093
  %v1190 = vunpack.c.l.b16 %v1094
  %v1191 = vunpack.c.l.b16 %v1095
  %v1192 = vunpack.c.l.b16 %v1096
  %v1193 = vunpack.c.l.b16 %v1097
  %v1194 = vunpack.c.l.b16 %v1098
  %v1195 = vunpack.c.l.b16 %v1099
  %v1196 = vunpack.c.l.b16 %v1100
  %v1197 = vpack.c.b16 %v1150, %v1149
  %v1198 = vpack.c.b16 %v1152, %v1151
  %v1199 = vpack.c.b16 %v1154, %v1153
  %v1200 = vpack.c.b16 %v1156, %v1155
  %v1201 = vpack.c.b16 %v1158, %v1157
  %v1202 = vpack.c.b16 %v1160, %v1159
  %v1203 = vpack.c.b16 %v1162, %v1161
  %v1204 = vpack.c.b16 %v1164, %v1163
  %v1205 = vpack.c.b16 %v1166, %v1165
  %v1206 = vpack.c.b16 %v1168, %v1167
  %v1207 = vpack.c.b16 %v1170, %v1169
  %v1208 = vpack.c.b16 %v1172, %v1171
  %v1209 = vpack.c.b16 %v1174, %v1173
  %v1210 = vpack.c.b16 %v1176, %v1175
  %v1211 = vpack.c.b16 %v1178, %v1177
  %v1212 = vpack.c.b16 %v1180, %v1179
  %v1213 = vpack.c.b16 %v1182, %v1181
  %v1214 = vpack.c.b16 %v1184, %v1183
  %v1215 = vpack.c.b16 %v1186, %v1185
  %v1216 = vpack.c.b16 %v1188, %v1187
  %v1217 = vpack.c.b16 %v1190, %v1189
  %v1218 = vpack.c.b16 %v1192, %v1191
  %v1219 = vpack.c.b16 %v1194, %v1193
  %v1220 = vpack.c.b16 %v1196, %v1195
  %1245 = vmatprep.subr.bf16.mxu0 0
  %1246 = vmatpush1.bf16.msra.mxu0 %v1197
  %1247 = vmatprep.subr.bf16.mxu0 0
  %1248 = vmatpush1.bf16.msra.mxu0 %v1198
  %1249 = vmatprep.subr.bf16.mxu0 0
  %1250 = vmatpush1.bf16.msra.mxu0 %v1199
  %1251 = vmatprep.subr.bf16.mxu0 0
  %1252 = vmatpush1.bf16.msra.mxu0 %v1200
  %1253 = vmatprep.subr.bf16.mxu0 0
  %1254 = vmatpush1.bf16.msra.mxu0 %v1201
  %1255 = vmatprep.subr.bf16.mxu0 0
  %1256 = vmatpush1.bf16.msra.mxu0 %v1202
  %1257 = vmatprep.subr.bf16.mxu0 0
  %1258 = vmatpush1.bf16.msra.mxu0 %v1203
  %1259 = vmatprep.subr.bf16.mxu0 0
  %1260 = vmatpush1.bf16.msra.mxu0 %v1204
  %1261 = vmatprep.subr.bf16.mxu0 0
  %1262 = vmatpush1.bf16.msra.mxu0 %v1205
  %1263 = vmatprep.subr.bf16.mxu0 0
  %1264 = vmatpush1.bf16.msra.mxu0 %v1206
  %1265 = vmatprep.subr.bf16.mxu0 0
  %1266 = vmatpush1.bf16.msra.mxu0 %v1207
  %1267 = vmatprep.subr.bf16.mxu0 0
  %1268 = vmatpush1.bf16.msra.mxu0 %v1208
  %1269 = vmatprep.subr.bf16.mxu0 0
  %1270 = vmatpush1.bf16.msra.mxu0 %v1209
  %1271 = vmatprep.subr.bf16.mxu0 0
  %1272 = vmatpush1.bf16.msra.mxu0 %v1210
  %1273 = vmatprep.subr.bf16.mxu0 0
  %1274 = vmatpush1.bf16.msra.mxu0 %v1211
  %1275 = vmatprep.subr.bf16.mxu0 0
  %1276 = vmatpush1.bf16.msra.mxu0 %v1212
  %1277 = vmatprep.mubr.bf16.mxu0 %v1048
  %1278 = vmatmul.mubr.bf16.gmra.mrb[0].mxu0 %v1047
  %v1279 = vpop.f32.mrb[0].mxu0
  %v1280 = vadd.f32 0.0, %v1279
  %v1281 = vpop.f32.mrb[0].mxu0
  %v1282 = vpop.f32.mrb[0].mxu0
  %v1283 = vadd.f32 0.0, %v1282
  %v1284 = vpop.f32.mrb[0].mxu0
  %1285 = vmatprep.mubr.bf16.mxu0 %v1051
  %1286 = vmatmul.mubr.bf16.gmra.mrb[0].mxu0 %v1050
  %v1287 = vpop.f32.mrb[0].mxu0
  %v1288 = vadd.f32 0.0, %v1287
  %v1289 = vpop.f32.mrb[0].mxu0
  %v1290 = vpop.f32.mrb[0].mxu0
  %v1291 = vadd.f32 0.0, %v1290
  %v1292 = vpop.f32.mrb[0].mxu0
  %1293 = vdwg.mxu0
  %1294 = vmatprep.subr.bf16.mxu0 0
  %1295 = vmatpush1.bf16.msra.mxu0 %v1213
  %1296 = vmatprep.subr.bf16.mxu0 0
  %1297 = vmatpush1.bf16.msra.mxu0 %v1214
  %1298 = vmatprep.subr.bf16.mxu0 0
  %1299 = vmatpush1.bf16.msra.mxu0 %v1215
  %1300 = vmatprep.subr.bf16.mxu0 0
  %1301 = vmatpush1.bf16.msra.mxu0 %v1216
  %1302 = vmatprep.subr.bf16.mxu0 0
  %1303 = vmatpush1.bf16.msra.mxu0 %v1217
  %1304 = vmatprep.subr.bf16.mxu0 0
  %1305 = vmatpush1.bf16.msra.mxu0 %v1218
  %1306 = vmatprep.subr.bf16.mxu0 0
  %1307 = vmatpush1.bf16.msra.mxu0 %v1219
  %1308 = vmatprep.subr.bf16.mxu0 0
  %1309 = vmatpush1.bf16.msra.mxu0 %v1220
  %1310 = vmatprep.subr.bf16.mxu0 0
  %1311 = vmatpush1.bf16.msra.mxu0 0
  %1312 = vmatprep.subr.bf16.mxu0 0
  %1313 = vmatpush1.bf16.msra.mxu0 0
  %1314 = vmatprep.subr.bf16.mxu0 0
  %1315 = vmatpush1.bf16.msra.mxu0 0
  %1316 = vmatprep.subr.bf16.mxu0 0
  %1317 = vmatpush1.bf16.msra.mxu0 0
  %1318 = vmatprep.subr.bf16.mxu0 0
  %1319 = vmatpush1.bf16.msra.mxu0 0
  %1320 = vmatprep.subr.bf16.mxu0 0
  %1321 = vmatpush1.bf16.msra.mxu0 0
  %1322 = vmatprep.subr.bf16.mxu0 0
  %1323 = vmatpush1.bf16.msra.mxu0 0
  %1324 = vmatprep.subr.bf16.mxu0 0
  %1325 = vmatpush1.bf16.msra.mxu0 0
  %1326 = vmatprep.mubr.bf16.mxu0 0
  %1327 = vmatmul.mubr.bf16.gmra.mrb[0].mxu0 %v1049
  %v1328 = vpop.f32.mrb[0].mxu0
  %v1329 = vadd.f32 %v1280, %v1328
  %v1330 = vpop.f32.mrb[0].mxu0
  %v1331 = vpop.f32.mrb[0].mxu0
  %v1332 = vadd.f32 %v1283, %v1331
  %v1333 = vpop.f32.mrb[0].mxu0
  %1334 = vmatprep.mubr.bf16.mxu0 0
  %1335 = vmatmul.mubr.bf16.gmra.mrb[0].mxu0 %v1052
  %v1336 = vpop.f32.mrb[0].mxu0
  %v1337 = vadd.f32 %v1288, %v1336
  %v1338 = vpop.f32.mrb[0].mxu0
  %v1339 = vpop.f32.mrb[0].mxu0
  %v1340 = vadd.f32 %v1291, %v1339
  %v1341 = vpop.f32.mrb[0].mxu0
  %1342 = vdwg.mxu0
  %v1343 = vld [vmem:[%s9] sm:$0x1]
  %v1345 = vlaneseq
  %v1346 = vshrl.u32 %v1345, 7
  %v1347 = vsub.s32 0, %v1346
  %v1348 = vrot.slane %v1343, %v1347
  %v1350 = vmul.f32 %v1329, %v1348
  %v1351 = vmul.f32 %v1332, %v1348
  %v1352 = vmul.f32 %v1337, %v1348
  %v1353 = vmul.f32 %v1340, %v1348
  %v1354 = vld [vmem:[%s10] sm:$0x1]
  %v1356 = vlaneseq
  %v1357 = vshrl.u32 %v1356, 7
  %v1358 = vsub.s32 0, %v1357
  %v1359 = vrot.slane %v1354, %v1358
  %v1361 = vadd.f32 %v1350, %v1359
  %v1362 = vadd.f32 %v1351, %v1359
  %v1363 = vadd.f32 %v1352, %v1359
  %v1364 = vadd.f32 %v1353, %v1359
  %v1365 = vmul.f32 %v1361, 0.5
  %v1366 = vmul.f32 %v1362, 0.5
  %v1367 = vmul.f32 %v1363, 0.5
  %v1368 = vmul.f32 %v1364, 0.5
  %v1369 = vmul.f32 %v1361, %v1014
  %v1370 = vmul.f32 %v1362, %v1014
  %v1371 = vmul.f32 %v1363, %v1014
  %v1372 = vmul.f32 %v1364, %v1014
  %v1373 = verf.f32.pop %v1369
  %v1374 = verf.f32.pop %v1370
  %v1375 = verf.f32.pop %v1371
  %v1376 = verf.f32.pop %v1372
  %v1377 = vadd.f32 %v1373, 1.0
  %v1378 = vadd.f32 %v1374, 1.0
  %v1379 = vadd.f32 %v1375, 1.0
  %v1380 = vadd.f32 %v1376, 1.0
  %v1381 = vmul.f32 %v1365, %v1377
  %v1382 = vmul.f32 %v1366, %v1378
  %v1383 = vmul.f32 %v1367, %v1379
  %v1384 = vmul.f32 %v1368, %v1380
  %1385 = vst [vmem:[%s11] sm:$0xff] %v1381
  %1386 = vst [vmem:[%s11 + $0x8] sm:$0xff] %v1382
  %1387 = vst [vmem:[%s11 + $0x10] sm:$0xff] %v1383
  %1388 = vst [vmem:[%s11 + $0x18] sm:$0xff] %v1384
  // Predicated region
  $region46: #{up_forward.1} parent=0 // pred_check
    _
  $region47: #{up_forward.1} parent=0 // pred_check_branch
    %1390 = sbr.rel (0) target = $region49
  $region48: #{up_forward.1} parent=0 // pred_region
    _
  $region49: #{up_forward.1} parent=0 // pred_fallthru
    _
  // Predicated region
  $region50: #{up_forward.1} parent=0 // pred_check
    _
  $region51: #{up_forward.1} parent=0 // pred_check_branch
    %1392 = sbr.rel (0) target = $region53
  $region52: #{up_forward.1} parent=0 // pred_region
    _
  $region53: #{up_forward.1} parent=0 // pred_fallthru
    _

</llo_original>
